<compile_context>
chip_gen: v7x
topology: tpu7x:2x2x1
jax: 0.10.0
libtpu: 0.0.40
codegen_flags: <defaults>
</compile_context>

<pallas_src>
from functools import partial

import jax
import jax.numpy as jnp
from jax.experimental import pallas as pl
from jax.experimental.pallas import tpu as pltpu

LANE = 128  # TPU lane width: all kernel outputs are padded to this on the last dim.


def _round_up(x, m):
    return (x + m - 1) // m * m


# ---------------------------------------------------------------------------
# Pallas kernels
# ---------------------------------------------------------------------------
def _cbr_kernel(x_ref, w_ref, b_ref, o_ref):
    # x: (TM, K) bf16 im2col patches, w: (K, 128) bf16 (BN scale pre-folded),
    # b: (1, 128) f32.  Epilogue: bias + ReLU in f32, store bf16, lane-dense.
    acc = jnp.dot(x_ref[...], w_ref[...], preferred_element_type=jnp.float32)
    o_ref[...] = jnp.maximum(acc + b_ref[...], 0.0).astype(o_ref.dtype)


def _tail_kernel(x_ref, w1_ref, b1_ref, pool_ref, w2_ref, b2_ref,
                 feat_ref, logit_ref):
    # Fused: 1x1 CBRelu -> AdaptiveAvgPool2d(1) -> Linear.
    # x: (B*S, 128) bf16 (padded channels of t3 output)
    # w1: (128, 128) bf16, b1: (1, 128) f32        -> 1x1 conv (BN folded)
    # pool: (B, B*S) f32 block-diagonal of 1/S     -> spatial mean as matmul
    # w2: (128, 128) f32, b2: (1, 128) f32         -> classifier Linear
    h = jnp.dot(x_ref[...], w1_ref[...], preferred_element_type=jnp.float32)
    h = jnp.maximum(h + b1_ref[...], 0.0)                       # (B*S, 128) f32
    feat_ref[...] = h                                           # inter1 (padded)
    pooled = jnp.dot(pool_ref[...], h, preferred_element_type=jnp.float32)  # (B,128)
    logit_ref[...] = (
        jnp.dot(pooled, w2_ref[...], preferred_element_type=jnp.float32)
        + b2_ref[...]
    )


# ---------------------------------------------------------------------------
# Pallas wrappers
# ---------------------------------------------------------------------------
def _cbr_conv(patches, w, b, *, tm=256):
    """Tiled CBRelu matmul: (M, K) @ (K, 128) -> (M, 128) bf16."""
    M, K = patches.shape
    Mp = _round_up(M, 8)
    tm = min(tm, Mp)          # TM sized for v7x 32 MiB scoped VMEM (large headroom)
    Mp = _round_up(Mp, tm)
    if Mp != M:
        patches = jnp.pad(patches, ((0, Mp - M), (0, 0)))
    out = pl.pallas_call(
        _cbr_kernel,
        out_shape=jax.ShapeDtypeStruct((Mp, LANE), jnp.bfloat16),
        grid=(Mp // tm,),
        in_specs=[
            pl.BlockSpec((tm, K), lambda i: (i, 0)),
            pl.BlockSpec((K, LANE), lambda i: (0, 0)),
            pl.BlockSpec((1, LANE), lambda i: (0, 0)),
        ],
        out_specs=pl.BlockSpec((tm, LANE), lambda i: (i, 0)),
        compiler_params=pltpu.CompilerParams(
            dimension_semantics=("parallel",)),
    )(patches, w, b)
    return out[:M]


def _tail(feats2d, ch_w, ch_b, lin_w, lin_b, pool):
    """Fused 1x1 CBRelu + spatial mean + Linear."""
    M3, Cp = feats2d.shape
    B = pool.shape[0]
    return pl.pallas_call(
        _tail_kernel,
        out_shape=(
            jax.ShapeDtypeStruct((M3, LANE), jnp.float32),   # inter1 (padded lanes)
            jax.ShapeDtypeStruct((B, LANE), jnp.float32),    # logits (padded lanes)
        ),
        grid=(1,),
        in_specs=[
            pl.BlockSpec((M3, Cp), lambda i: (0, 0)),
            pl.BlockSpec((Cp, LANE), lambda i: (0, 0)),
            pl.BlockSpec((1, LANE), lambda i: (0, 0)),
            pl.BlockSpec((B, M3), lambda i: (0, 0)),
            pl.BlockSpec((LANE, LANE), lambda i: (0, 0)),
            pl.BlockSpec((1, LANE), lambda i: (0, 0)),
        ],
        out_specs=(
            pl.BlockSpec((M3, LANE), lambda i: (0, 0)),
            pl.BlockSpec((B, LANE), lambda i: (0, 0)),
        ),
        compiler_params=pltpu.CompilerParams(
            dimension_semantics=("arbitrary",)),
    )(feats2d, ch_w, ch_b, pool, lin_w, lin_b)


# ---------------------------------------------------------------------------
# JAX glue: im2col patch extraction (layout plumbing, not the hot path)
# ---------------------------------------------------------------------------
def _im2col(x_nhwc, k, stride, padding):
    B, H, W, C = x_nhwc.shape
    if padding:
        x_nhwc = jnp.pad(
            x_nhwc, ((0, 0), (padding, padding), (padding, padding), (0, 0)))
    Hp, Wp = H + 2 * padding, W + 2 * padding
    OH = (Hp - k) // stride + 1
    OW = (Wp - k) // stride + 1
    cols = []
    for ky in range(k):
        for kx in range(k):
            cols.append(
                x_nhwc[:,
                       ky: ky + (OH - 1) * stride + 1: stride,
                       kx: kx + (OW - 1) * stride + 1: stride,
                       :])
    patches = jnp.concatenate(cols, axis=-1)          # order (ky, kx, cin)
    return patches.reshape(B * OH * OW, k * k * C).astype(jnp.bfloat16), (B, OH, OW)


# ---------------------------------------------------------------------------
# Parameter construction (deterministic, synthetic; BN folded into weights)
# ---------------------------------------------------------------------------
def _make_cbrelu_params(key, cin, cout, k, pad_cin_to=None):
    kw, kg, kb, km, kv = jax.random.split(key, 5)
    w = 0.1 * jax.random.normal(kw, (cout, cin, k, k), jnp.float32)  # torch layout
    gamma = 1.0 + 0.1 * jax.random.normal(kg, (cout,), jnp.float32)
    beta = 0.1 * jax.random.normal(kb, (cout,), jnp.float32)
    r_mean = 0.1 * jax.random.normal(km, (cout,), jnp.float32)
    r_var = 0.5 + jnp.abs(jax.random.normal(kv, (cout,), jnp.float32))
    eps = 1e-5
    scale = gamma / jnp.sqrt(r_var + eps)
    bias = beta - r_mean * scale
    # (cout,cin,k,k) -> (k,k,cin,cout) -> (k*k*cin, cout), fold BN scale in.
    kkcin = k * k * cin
    w_mat = jnp.transpose(w, (2, 3, 1, 0)).reshape(kkcin, cout) * scale[None, :]
    rows = pad_cin_to if pad_cin_to is not None else kkcin
    w_pad = jnp.zeros((rows, LANE), jnp.float32).at[:kkcin, :cout].set(w_mat)
    b_pad = jnp.zeros((1, LANE), jnp.float32).at[:, :cout].set(bias[None, :])
    return {"w": w_pad.astype(jnp.bfloat16), "b": b_pad}


def make_spatial_params(key, in_channels, inter_channels, inter_features, num_class):
    k1, k2, k3, k4, k5, k6 = jax.random.split(key, 6)
    lin_w = 0.1 * jax.random.normal(k5, (num_class, inter_features), jnp.float32)
    lin_b = 0.1 * jax.random.normal(k6, (num_class,), jnp.float32)
    return {
        "t1": _make_cbrelu_params(k1, in_channels, inter_channels, 3),
        "t2": _make_cbrelu_params(k2, inter_channels, inter_channels, 3),
        "t3": _make_cbrelu_params(k3, inter_channels, inter_channels, 3),
        # 1x1 "channels" CBRelu consumes the lane-padded t3 output directly.
        "ch": _make_cbrelu_params(k4, inter_channels, inter_features, 1,
                                  pad_cin_to=LANE),
        "lin_w": jnp.zeros((LANE, LANE), jnp.float32)
                    .at[:inter_features, :num_class].set(lin_w.T),
        "lin_b": jnp.zeros((1, LANE), jnp.float32)
                    .at[:, :num_class].set(lin_b[None, :]),
    }


# ---------------------------------------------------------------------------
# Forward pass (matches Spatial.forward): returns (inter1 [NCHW], logits)
# ---------------------------------------------------------------------------
@partial(jax.jit, static_argnames=("cfg",))
def spatial_forward(x_nchw, params, cfg):
    inter_channels, inter_features, num_class = cfg
    x = jnp.transpose(x_nchw, (0, 2, 3, 1)).astype(jnp.float32)   # NHWC

    # self.transform: three CBRelu layers (conv-as-matmul, BN folded, ReLU fused)
    p, d = _im2col(x, 3, 4, 0)
    x = _cbr_conv(p, params["t1"]["w"], params["t1"]["b"])
    x = x[:, :inter_channels].reshape(*d, inter_channels)

    p, d = _im2col(x, 3, 4, 0)
    x = _cbr_conv(p, params["t2"]["w"], params["t2"]["b"])
    x = x[:, :inter_channels].reshape(*d, inter_channels)

    p, (B, OH, OW) = _im2col(x, 3, 2, 1)
    y = _cbr_conv(p, params["t3"]["w"], params["t3"]["b"])       # (B*OH*OW, 128) bf16

    # self.channels + self.classifier fused into one kernel.
    S = OH * OW
    pool = jnp.repeat(jnp.eye(B, dtype=jnp.float32), S, axis=1) / float(S)
    feat, logits = _tail(y, params["ch"]["w"], params["ch"]["b"],
                         params["lin_w"], params["lin_b"], pool)

    inter1 = feat[:, :inter_features].reshape(B, OH, OW, inter_features)
    inter1 = jnp.transpose(inter1, (0, 3, 1, 2))                 # NCHW
    return inter1, logits[:, :num_class]


if __name__ == "__main__":
    # Small shapes consistent with the module:
    #   input (B=2, C=4, H=W=64); cfg: inter_ch=8, __fc_features__=32, num_class=10
    B, C, H, W = 2, 4, 64, 64
    inter_ch, inter_feats, num_class = 8, 32, 10

    key = jax.random.PRNGKey(0)
    k_x, k_p = jax.random.split(key)
    x = jax.random.normal(k_x, (B, C, H, W), jnp.float32)
    params = make_spatial_params(k_p, C, inter_ch, inter_feats, num_class)

    inter1, logits = spatial_forward(x, params, (inter_ch, inter_feats, num_class))
    jax.block_until_ready(inter1)
    jax.block_until_ready(logits)

    # Sanity: 64 -(3,4,0)-> 16 -(3,4,0)-> 4 -(3,2,1)-> 2; inter1 (2,32,2,2), logits (2,10)
    assert inter1.shape == (B, inter_feats, 2, 2)
    assert logits.shape == (B, num_class)
    print("KERNEL_OK")
</pallas_src>

<mosaic_0001>
module attributes {stable_mosaic.version = 11 : i64} {
  func.func @_cbr_kernel(%arg0: i32, %arg1: memref<256x36xbf16, #tpu.memory_space<vmem>>, %arg2: memref<36x128xbf16, #tpu.memory_space<vmem>>, %arg3: memref<1x128xf32, #tpu.memory_space<vmem>>, %arg4: memref<256x128xbf16, #tpu.memory_space<vmem>>) attributes {dimension_semantics = [#tpu.dimension_semantics<parallel>], iteration_bounds = array<i64: 2>, scalar_prefetch = 0 : i64, scratch_operands = 0 : i64, tpu.core_type = #tpu.core_type<tc>, window_params = [{transform_indices = @transform_0, window_bounds = array<i64: 256, 36>}, {pipeline_mode = #tpu.pipeline_mode<synchronous>, transform_indices = @transform_1, window_bounds = array<i64: 36, 128>}, {pipeline_mode = #tpu.pipeline_mode<synchronous>, transform_indices = @transform_2, window_bounds = array<i64: 1, 128>}, {transform_indices = @transform_3, window_bounds = array<i64: 256, 128>}]} {
    %c0 = arith.constant 0 : index
    %c0_0 = arith.constant 0 : index
    %0 = vector.load %arg1[%c0, %c0_0] : memref<256x36xbf16, #tpu.memory_space<vmem>>, vector<256x36xbf16>
    %c0_1 = arith.constant 0 : index
    %c0_2 = arith.constant 0 : index
    %1 = vector.load %arg2[%c0_1, %c0_2] : memref<36x128xbf16, #tpu.memory_space<vmem>>, vector<36x128xbf16>
    %cst = arith.constant dense<0.000000e+00> : vector<256x128xf32>
    %2 = tpu.matmul %0, %1, %cst {dimension_numbers = #tpu.dot_dimension_numbers<[1], [0], [0], [1], [0, 0, 1, 1], [], []>} : vector<256x36xbf16>, vector<36x128xbf16>, vector<256x128xf32> -> vector<256x128xf32>
    %c0_3 = arith.constant 0 : index
    %c0_4 = arith.constant 0 : index
    %3 = vector.load %arg3[%c0_3, %c0_4] : memref<1x128xf32, #tpu.memory_space<vmem>>, vector<1x128xf32>
    %4 = vector.broadcast %3 : vector<1x128xf32> to vector<256x128xf32>
    %5 = arith.addf %2, %4 : vector<256x128xf32>
    %cst_5 = arith.constant 0.000000e+00 : f32
    %6 = vector.broadcast %cst_5 : f32 to vector<256x128xf32>
    %7 = arith.maximumf %5, %6 : vector<256x128xf32>
    %8 = arith.truncf %7 : vector<256x128xf32> to vector<256x128xbf16>
    %c0_6 = arith.constant 0 : index
    %c0_7 = arith.constant 0 : index
    %9 = vector.load %arg4[%c0_6, %c0_7] : memref<256x128xbf16, #tpu.memory_space<vmem>>, vector<256x128xbf16>
    tpu.vector_store %arg4[%c0_6, %c0_7], %8 {strides = array<i32>} : memref<256x128xbf16, #tpu.memory_space<vmem>>, vector<256x128xbf16>,
    return
  }
  func.func @transform_0(%arg0: i32) -> (i32, i32) {
    %c0_i32 = arith.constant 0 : i32
    %c0_i32_0 = arith.constant 0 : i32
    return %arg0, %c0_i32 : i32, i32
  }
  func.func @transform_1(%arg0: i32) -> (i32, i32) {
    %c0_i32 = arith.constant 0 : i32
    %c0_i32_0 = arith.constant 0 : i32
    %c0_i32_1 = arith.constant 0 : i32
    return %c0_i32, %c0_i32_0 : i32, i32
  }
  func.func @transform_2(%arg0: i32) -> (i32, i32) {
    %c0_i32 = arith.constant 0 : i32
    %c0_i32_0 = arith.constant 0 : i32
    %c0_i32_1 = arith.constant 0 : i32
    return %c0_i32, %c0_i32_0 : i32, i32
  }
  func.func @transform_3(%arg0: i32) -> (i32, i32) {
    %c0_i32 = arith.constant 0 : i32
    %c0_i32_0 = arith.constant 0 : i32
    return %arg0, %c0_i32 : i32, i32
  }
}

module attributes {stable_mosaic.version = 11 : i64} {
  func.func @_cbr_kernel(%arg0: i32, %arg1: memref<32x72xbf16, #tpu.memory_space<vmem>>, %arg2: memref<72x128xbf16, #tpu.memory_space<vmem>>, %arg3: memref<1x128xf32, #tpu.memory_space<vmem>>, %arg4: memref<32x128xbf16, #tpu.memory_space<vmem>>) attributes {dimension_semantics = [#tpu.dimension_semantics<parallel>], iteration_bounds = array<i64: 1>, scalar_prefetch = 0 : i64, scratch_operands = 0 : i64, tpu.core_type = #tpu.core_type<tc>, window_params = [{transform_indices = @transform_0, window_bounds = array<i64: 32, 72>}, {pipeline_mode = #tpu.pipeline_mode<synchronous>, transform_indices = @transform_1, window_bounds = array<i64: 72, 128>}, {pipeline_mode = #tpu.pipeline_mode<synchronous>, transform_indices = @transform_2, window_bounds = array<i64: 1, 128>}, {transform_indices = @transform_3, window_bounds = array<i64: 32, 128>}]} {
    %c0 = arith.constant 0 : index
    %c0_0 = arith.constant 0 : index
    %0 = vector.load %arg1[%c0, %c0_0] : memref<32x72xbf16, #tpu.memory_space<vmem>>, vector<32x72xbf16>
    %c0_1 = arith.constant 0 : index
    %c0_2 = arith.constant 0 : index
    %1 = vector.load %arg2[%c0_1, %c0_2] : memref<72x128xbf16, #tpu.memory_space<vmem>>, vector<72x128xbf16>
    %cst = arith.constant dense<0.000000e+00> : vector<32x128xf32>
    %2 = tpu.matmul %0, %1, %cst {dimension_numbers = #tpu.dot_dimension_numbers<[1], [0], [0], [1], [0, 0, 1, 1], [], []>} : vector<32x72xbf16>, vector<72x128xbf16>, vector<32x128xf32> -> vector<32x128xf32>
    %c0_3 = arith.constant 0 : index
    %c0_4 = arith.constant 0 : index
    %3 = vector.load %arg3[%c0_3, %c0_4] : memref<1x128xf32, #tpu.memory_space<vmem>>, vector<1x128xf32>
    %4 = vector.broadcast %3 : vector<1x128xf32> to vector<32x128xf32>
    %5 = arith.addf %2, %4 : vector<32x128xf32>
    %cst_5 = arith.constant 0.000000e+00 : f32
    %6 = vector.broadcast %cst_5 : f32 to vector<32x128xf32>
    %7 = arith.maximumf %5, %6 : vector<32x128xf32>
    %8 = arith.truncf %7 : vector<32x128xf32> to vector<32x128xbf16>
    %c0_6 = arith.constant 0 : index
    %c0_7 = arith.constant 0 : index
    %9 = vector.load %arg4[%c0_6, %c0_7] : memref<32x128xbf16, #tpu.memory_space<vmem>>, vector<32x128xbf16>
    tpu.vector_store %arg4[%c0_6, %c0_7], %8 {strides = array<i32>} : memref<32x128xbf16, #tpu.memory_space<vmem>>, vector<32x128xbf16>,
    return
  }
  func.func @transform_0(%arg0: i32) -> (i32, i32) {
    %c0_i32 = arith.constant 0 : i32
    %c0_i32_0 = arith.constant 0 : i32
    return %arg0, %c0_i32 : i32, i32
  }
  func.func @transform_1(%arg0: i32) -> (i32, i32) {
    %c0_i32 = arith.constant 0 : i32
    %c0_i32_0 = arith.constant 0 : i32
    %c0_i32_1 = arith.constant 0 : i32
    return %c0_i32, %c0_i32_0 : i32, i32
  }
  func.func @transform_2(%arg0: i32) -> (i32, i32) {
    %c0_i32 = arith.constant 0 : i32
    %c0_i32_0 = arith.constant 0 : i32
    %c0_i32_1 = arith.constant 0 : i32
    return %c0_i32, %c0_i32_0 : i32, i32
  }
  func.func @transform_3(%arg0: i32) -> (i32, i32) {
    %c0_i32 = arith.constant 0 : i32
    %c0_i32_0 = arith.constant 0 : i32
    return %arg0, %c0_i32 : i32, i32
  }
}

module attributes {stable_mosaic.version = 11 : i64} {
  func.func @_cbr_kernel(%arg0: i32, %arg1: memref<8x72xbf16, #tpu.memory_space<vmem>>, %arg2: memref<72x128xbf16, #tpu.memory_space<vmem>>, %arg3: memref<1x128xf32, #tpu.memory_space<vmem>>, %arg4: memref<8x128xbf16, #tpu.memory_space<vmem>>) attributes {dimension_semantics = [#tpu.dimension_semantics<parallel>], iteration_bounds = array<i64: 1>, scalar_prefetch = 0 : i64, scratch_operands = 0 : i64, tpu.core_type = #tpu.core_type<tc>, window_params = [{transform_indices = @transform_0, window_bounds = array<i64: 8, 72>}, {pipeline_mode = #tpu.pipeline_mode<synchronous>, transform_indices = @transform_1, window_bounds = array<i64: 72, 128>}, {pipeline_mode = #tpu.pipeline_mode<synchronous>, transform_indices = @transform_2, window_bounds = array<i64: 1, 128>}, {transform_indices = @transform_3, window_bounds = array<i64: 8, 128>}]} {
    %c0 = arith.constant 0 : index
    %c0_0 = arith.constant 0 : index
    %0 = vector.load %arg1[%c0, %c0_0] : memref<8x72xbf16, #tpu.memory_space<vmem>>, vector<8x72xbf16>
    %c0_1 = arith.constant 0 : index
    %c0_2 = arith.constant 0 : index
    %1 = vector.load %arg2[%c0_1, %c0_2] : memref<72x128xbf16, #tpu.memory_space<vmem>>, vector<72x128xbf16>
    %cst = arith.constant dense<0.000000e+00> : vector<8x128xf32>
    %2 = tpu.matmul %0, %1, %cst {dimension_numbers = #tpu.dot_dimension_numbers<[1], [0], [0], [1], [0, 0, 1, 1], [], []>} : vector<8x72xbf16>, vector<72x128xbf16>, vector<8x128xf32> -> vector<8x128xf32>
    %c0_3 = arith.constant 0 : index
    %c0_4 = arith.constant 0 : index
    %3 = vector.load %arg3[%c0_3, %c0_4] : memref<1x128xf32, #tpu.memory_space<vmem>>, vector<1x128xf32>
    %4 = vector.broadcast %3 : vector<1x128xf32> to vector<8x128xf32>
    %5 = arith.addf %2, %4 : vector<8x128xf32>
    %cst_5 = arith.constant 0.000000e+00 : f32
    %6 = vector.broadcast %cst_5 : f32 to vector<8x128xf32>
    %7 = arith.maximumf %5, %6 : vector<8x128xf32>
    %8 = arith.truncf %7 : vector<8x128xf32> to vector<8x128xbf16>
    %c0_6 = arith.constant 0 : index
    %c0_7 = arith.constant 0 : index
    %9 = vector.load %arg4[%c0_6, %c0_7] : memref<8x128xbf16, #tpu.memory_space<vmem>>, vector<8x128xbf16>
    tpu.vector_store %arg4[%c0_6, %c0_7], %8 {strides = array<i32>} : memref<8x128xbf16, #tpu.memory_space<vmem>>, vector<8x128xbf16>,
    return
  }
  func.func @transform_0(%arg0: i32) -> (i32, i32) {
    %c0_i32 = arith.constant 0 : i32
    %c0_i32_0 = arith.constant 0 : i32
    return %arg0, %c0_i32 : i32, i32
  }
  func.func @transform_1(%arg0: i32) -> (i32, i32) {
    %c0_i32 = arith.constant 0 : i32
    %c0_i32_0 = arith.constant 0 : i32
    %c0_i32_1 = arith.constant 0 : i32
    return %c0_i32, %c0_i32_0 : i32, i32
  }
  func.func @transform_2(%arg0: i32) -> (i32, i32) {
    %c0_i32 = arith.constant 0 : i32
    %c0_i32_0 = arith.constant 0 : i32
    %c0_i32_1 = arith.constant 0 : i32
    return %c0_i32, %c0_i32_0 : i32, i32
  }
  func.func @transform_3(%arg0: i32) -> (i32, i32) {
    %c0_i32 = arith.constant 0 : i32
    %c0_i32_0 = arith.constant 0 : i32
    return %arg0, %c0_i32 : i32, i32
  }
}

module attributes {stable_mosaic.version = 11 : i64} {
  func.func @_tail_kernel(%arg0: i32, %arg1: memref<8x128xbf16, #tpu.memory_space<vmem>>, %arg2: memref<128x128xbf16, #tpu.memory_space<vmem>>, %arg3: memref<1x128xf32, #tpu.memory_space<vmem>>, %arg4: memref<2x8xf32, #tpu.memory_space<vmem>>, %arg5: memref<128x128xf32, #tpu.memory_space<vmem>>, %arg6: memref<1x128xf32, #tpu.memory_space<vmem>>, %arg7: memref<8x128xf32, #tpu.memory_space<vmem>>, %arg8: memref<2x128xf32, #tpu.memory_space<vmem>>) attributes {dimension_semantics = [#tpu.dimension_semantics<arbitrary>], iteration_bounds = array<i64: 1>, scalar_prefetch = 0 : i64, scratch_operands = 0 : i64, tpu.core_type = #tpu.core_type<tc>, window_params = [{pipeline_mode = #tpu.pipeline_mode<synchronous>, transform_indices = @transform_0, window_bounds = array<i64: 8, 128>}, {pipeline_mode = #tpu.pipeline_mode<synchronous>, transform_indices = @transform_1, window_bounds = array<i64: 128, 128>}, {pipeline_mode = #tpu.pipeline_mode<synchronous>, transform_indices = @transform_2, window_bounds = array<i64: 1, 128>}, {pipeline_mode = #tpu.pipeline_mode<synchronous>, transform_indices = @transform_3, window_bounds = array<i64: 2, 8>}, {pipeline_mode = #tpu.pipeline_mode<synchronous>, transform_indices = @transform_4, window_bounds = array<i64: 128, 128>}, {pipeline_mode = #tpu.pipeline_mode<synchronous>, transform_indices = @transform_5, window_bounds = array<i64: 1, 128>}, {pipeline_mode = #tpu.pipeline_mode<synchronous>, transform_indices = @transform_6, window_bounds = array<i64: 8, 128>}, {pipeline_mode = #tpu.pipeline_mode<synchronous>, transform_indices = @transform_7, window_bounds = array<i64: 2, 128>}]} {
    %c0 = arith.constant 0 : index
    %c0_0 = arith.constant 0 : index
    %0 = vector.load %arg1[%c0, %c0_0] : memref<8x128xbf16, #tpu.memory_space<vmem>>, vector<8x128xbf16>
    %c0_1 = arith.constant 0 : index
    %c0_2 = arith.constant 0 : index
    %1 = vector.load %arg2[%c0_1, %c0_2] : memref<128x128xbf16, #tpu.memory_space<vmem>>, vector<128x128xbf16>
    %cst = arith.constant dense<0.000000e+00> : vector<8x128xf32>
    %2 = tpu.matmul %0, %1, %cst {dimension_numbers = #tpu.dot_dimension_numbers<[1], [0], [0], [1], [0, 0, 1, 1], [], []>} : vector<8x128xbf16>, vector<128x128xbf16>, vector<8x128xf32> -> vector<8x128xf32>
    %c0_3 = arith.constant 0 : index
    %c0_4 = arith.constant 0 : index
    %3 = vector.load %arg3[%c0_3, %c0_4] : memref<1x128xf32, #tpu.memory_space<vmem>>, vector<1x128xf32>
    %4 = vector.broadcast %3 : vector<1x128xf32> to vector<8x128xf32>
    %5 = arith.addf %2, %4 : vector<8x128xf32>
    %cst_5 = arith.constant 0.000000e+00 : f32
    %6 = vector.broadcast %cst_5 : f32 to vector<8x128xf32>
    %7 = arith.maximumf %5, %6 : vector<8x128xf32>
    %c0_6 = arith.constant 0 : index
    %c0_7 = arith.constant 0 : index
    %8 = vector.load %arg7[%c0_6, %c0_7] : memref<8x128xf32, #tpu.memory_space<vmem>>, vector<8x128xf32>
    tpu.vector_store %arg7[%c0_6, %c0_7], %7 {strides = array<i32>} : memref<8x128xf32, #tpu.memory_space<vmem>>, vector<8x128xf32>,
    %c0_8 = arith.constant 0 : index
    %c0_9 = arith.constant 0 : index
    %9 = vector.load %arg4[%c0_8, %c0_9] : memref<2x8xf32, #tpu.memory_space<vmem>>, vector<2x8xf32>
    %cst_10 = arith.constant dense<0.000000e+00> : vector<2x128xf32>
    %10 = tpu.matmul %9, %7, %cst_10 {dimension_numbers = #tpu.dot_dimension_numbers<[1], [0], [0], [1], [0, 0, 1, 1], [], []>} : vector<2x8xf32>, vector<8x128xf32>, vector<2x128xf32> -> vector<2x128xf32>
    %c0_11 = arith.constant 0 : index
    %c0_12 = arith.constant 0 : index
    %11 = vector.load %arg5[%c0_11, %c0_12] : memref<128x128xf32, #tpu.memory_space<vmem>>, vector<128x128xf32>
    %cst_13 = arith.constant dense<0.000000e+00> : vector<2x128xf32>
    %12 = tpu.matmul %10, %11, %cst_13 {dimension_numbers = #tpu.dot_dimension_numbers<[1], [0], [0], [1], [0, 0, 1, 1], [], []>} : vector<2x128xf32>, vector<128x128xf32>, vector<2x128xf32> -> vector<2x128xf32>
    %c0_14 = arith.constant 0 : index
    %c0_15 = arith.constant 0 : index
    %13 = vector.load %arg6[%c0_14, %c0_15] : memref<1x128xf32, #tpu.memory_space<vmem>>, vector<1x128xf32>
    %14 = vector.broadcast %13 : vector<1x128xf32> to vector<2x128xf32>
    %15 = arith.addf %12, %14 : vector<2x128xf32>
    %c0_16 = arith.constant 0 : index
    %c0_17 = arith.constant 0 : index
    %16 = vector.load %arg8[%c0_16, %c0_17] : memref<2x128xf32, #tpu.memory_space<vmem>>, vector<2x128xf32>
    tpu.vector_store %arg8[%c0_16, %c0_17], %15 {strides = array<i32>} : memref<2x128xf32, #tpu.memory_space<vmem>>, vector<2x128xf32>,
    return
  }
  func.func @transform_0(%arg0: i32) -> (i32, i32) {
    %c0_i32 = arith.constant 0 : i32
    %c0_i32_0 = arith.constant 0 : i32
    %c0_i32_1 = arith.constant 0 : i32
    return %c0_i32, %c0_i32_0 : i32, i32
  }
  func.func @transform_1(%arg0: i32) -> (i32, i32) {
    %c0_i32 = arith.constant 0 : i32
    %c0_i32_0 = arith.constant 0 : i32
    %c0_i32_1 = arith.constant 0 : i32
    return %c0_i32, %c0_i32_0 : i32, i32
  }
  func.func @transform_2(%arg0: i32) -> (i32, i32) {
    %c0_i32 = arith.constant 0 : i32
    %c0_i32_0 = arith.constant 0 : i32
    %c0_i32_1 = arith.constant 0 : i32
    return %c0_i32, %c0_i32_0 : i32, i32
  }
  func.func @transform_3(%arg0: i32) -> (i32, i32) {
    %c0_i32 = arith.constant 0 : i32
    %c0_i32_0 = arith.constant 0 : i32
    %c0_i32_1 = arith.constant 0 : i32
    return %c0_i32, %c0_i32_0 : i32, i32
  }
  func.func @transform_4(%arg0: i32) -> (i32, i32) {
    %c0_i32 = arith.constant 0 : i32
    %c0_i32_0 = arith.constant 0 : i32
    %c0_i32_1 = arith.constant 0 : i32
    return %c0_i32, %c0_i32_0 : i32, i32
  }
  func.func @transform_5(%arg0: i32) -> (i32, i32) {
    %c0_i32 = arith.constant 0 : i32
    %c0_i32_0 = arith.constant 0 : i32
    %c0_i32_1 = arith.constant 0 : i32
    return %c0_i32, %c0_i32_0 : i32, i32
  }
  func.func @transform_6(%arg0: i32) -> (i32, i32) {
    %c0_i32 = arith.constant 0 : i32
    %c0_i32_0 = arith.constant 0 : i32
    %c0_i32_1 = arith.constant 0 : i32
    return %c0_i32, %c0_i32_0 : i32, i32
  }
  func.func @transform_7(%arg0: i32) -> (i32, i32) {
    %c0_i32 = arith.constant 0 : i32
    %c0_i32_0 = arith.constant 0 : i32
    %c0_i32_1 = arith.constant 0 : i32
    return %c0_i32, %c0_i32_0 : i32, i32
  }
}

</mosaic_0001>

<llo_original>
// kernel: spatial_forward.4
$region0: #{spatial_forward.4}
  #allocation0 [shape = 'u32[]', space=smem, size = 0x4, offset = 0x4, fixed_abs, tag = 'smem constant byte address 0x4 - core index']
  #allocation1 [shape = 'u32[144,128]{1,0:T(1,128)}', space=vmem, size = 0x12000, scoped, tag = 'internal scratch']
  %s0 = inlined_call_operand.vmem [shape: bf16[512,36], index: 0, kind: input, shape index: {}]
  %s1 = inlined_call_operand.vmem [shape: bf16[36,128], index: 1, kind: input, shape index: {}]
  %s2 = inlined_call_operand.vmem [shape: f32[1,128], index: 2, kind: input, shape index: {}]
  %s3 = inlined_call_operand.vmem [shape: bf16[512,128], index: 3, kind: output, shape index: {}]
  %s4 = sld [smem:[#allocation0]]
  $region45: #{spatial_forward.4} parent=0
    _
  %s6 = ssub.s32 1, %s4
  %s7 = scalar_select 0, %s6, %s4
  loop: start=0, step=1, limit=4
  $region2: #{spatial_forward.4} parent=0 // loop_pre_header
    _
  $region3: #{spatial_forward.4} parent=0 // loop_header
    %s9 = sphi 0, %s13
    %p10 = scmp.ge.s32.totalorder %s9, 4
    %s19 = sphi 0, %s21
    %s22 = sphi 0, %s19
    %s23 = sphi 0, %s22
    %s39 = sphi 0, %s23
    %s43 = sphi 0, %s43
    %s45 = sphi 0, %s43
    %s46 = sphi 0, %s45
    %s60 = sphi 0, %s46
    %s64 = sphi 0, %s64
    %s66 = sphi 0, %s64
    %s67 = sphi 0, %s66
    %s81 = sphi 0, %s67
    %s87 = sphi 0, %s89
    %s90 = sphi 0, %s87
    %s91 = sphi 0, %s90
    %s107 = sphi 0, %s91
  $region4: #{spatial_forward.4} parent=0 // loop_header_branch
    %12 = sbr.rel (%p10) target = $region8
  $region5: #{spatial_forward.4} parent=0 // loop_body
    %s14 = ssub.s32 %s9, 1
    %s15 = ssub.s32 %s9, 2
    %s16 = sadd.s32 %s9, 1
    %s17 = ssub.s32 %s9, %s16
    %p18 = scmp.eq.s32.totalorder %s17, 0
    %s20 = sadd.s32 %s19, 1
    %s21 = scalar_select %p18, %s19, %s20
    %p24 = pneg %p18
    %p25 = scmp.eq.s32.totalorder %s9, 1
    %p26 = por %p24, %p25
    %p27 = scmp.ne.s32.totalorder %s19, %s22
    %p28 = scmp.eq.s32.totalorder %s9, 0
    %p29 = por %p27, %p28
    %p30 = scmp.ne.s32.totalorder %s19, %s22
    %p31 = scmp.eq.s32.totalorder %s14, 1
    %p32 = por %p30, %p31
    %p33 = scmp.ne.s32.totalorder %s22, %s23
    %p34 = scmp.eq.s32.totalorder %s14, 0
    %p35 = por %p33, %p34
    %p36 = scmp.ne.s32.totalorder %s22, %s23
    %p37 = scmp.eq.s32.totalorder %s15, 1
    %p38 = por %p36, %p37
    %p40 = scmp.ne.s32.totalorder %s23, %s39
    %p41 = scmp.eq.s32.totalorder %s15, 0
    %p42 = por %p40, %p41
    %s44 = sadd.s32 %s43, 1
    %p47 = scmp.eq.s32.totalorder %s9, 1
    %p48 = scmp.ne.s32.totalorder %s43, %s45
    %p49 = scmp.eq.s32.totalorder %s9, 0
    %p50 = por %p48, %p49
    %p51 = scmp.ne.s32.totalorder %s43, %s45
    %p52 = scmp.eq.s32.totalorder %s14, 1
    %p53 = por %p51, %p52
    %p54 = scmp.ne.s32.totalorder %s45, %s46
    %p55 = scmp.eq.s32.totalorder %s14, 0
    %p56 = por %p54, %p55
    %p57 = scmp.ne.s32.totalorder %s45, %s46
    %p58 = scmp.eq.s32.totalorder %s15, 1
    %p59 = por %p57, %p58
    %p61 = scmp.ne.s32.totalorder %s46, %s60
    %p62 = scmp.eq.s32.totalorder %s15, 0
    %p63 = por %p61, %p62
    %s65 = sadd.s32 %s64, 1
    %p68 = scmp.eq.s32.totalorder %s9, 1
    %p69 = scmp.ne.s32.totalorder %s64, %s66
    %p70 = scmp.eq.s32.totalorder %s9, 0
    %p71 = por %p69, %p70
    %p72 = scmp.ne.s32.totalorder %s64, %s66
    %p73 = scmp.eq.s32.totalorder %s14, 1
    %p74 = por %p72, %p73
    %p75 = scmp.ne.s32.totalorder %s66, %s67
    %p76 = scmp.eq.s32.totalorder %s14, 0
    %p77 = por %p75, %p76
    %p78 = scmp.ne.s32.totalorder %s66, %s67
    %p79 = scmp.eq.s32.totalorder %s15, 1
    %p80 = por %p78, %p79
    %p82 = scmp.ne.s32.totalorder %s67, %s81
    %p83 = scmp.eq.s32.totalorder %s15, 0
    %p84 = por %p82, %p83
    %s85 = ssub.s32 %s9, %s16
    %p86 = scmp.eq.s32.totalorder %s85, 0
    %s88 = sadd.s32 %s87, 1
    %s89 = scalar_select %p86, %s87, %s88
    %p92 = pneg %p86
    %p93 = scmp.eq.s32.totalorder %s9, 1
    %p94 = por %p92, %p93
    %p95 = scmp.ne.s32.totalorder %s87, %s90
    %p96 = scmp.eq.s32.totalorder %s9, 0
    %p97 = por %p95, %p96
    %p98 = scmp.ne.s32.totalorder %s87, %s90
    %p99 = scmp.eq.s32.totalorder %s14, 1
    %p100 = por %p98, %p99
    %p101 = scmp.ne.s32.totalorder %s90, %s91
    %p102 = scmp.eq.s32.totalorder %s14, 0
    %p103 = por %p101, %p102
    %p104 = scmp.ne.s32.totalorder %s90, %s91
    %p105 = scmp.eq.s32.totalorder %s15, 1
    %p106 = por %p104, %p105
    %p108 = scmp.ne.s32.totalorder %s91, %s107
    %p109 = scmp.eq.s32.totalorder %s15, 0
    %p110 = por %p108, %p109
    %p111 = scmp.le.s32.totalorder 1, %s9
    %p112 = scmp.lt.s32.totalorder %s9, 3
    %p113 = pnand %p111, %p112
    %p114 = pneg %p113
    // Predicated region
    $region9: #{spatial_forward.4} parent=5 // pred_check
      _
    $region10: #{spatial_forward.4} parent=5 // pred_check_branch
      %116 = sbr.rel (%p113) target = $region12
    $region11: #{spatial_forward.4} parent=5 // pred_region
      %s117 = ssub.s32 %s9, 1
      // Predicated region
      $region13: #{spatial_forward.4} parent=11 // pred_check
        %p118 = pneg %p56
      $region14: #{spatial_forward.4} parent=11 // pred_check_branch
        %120 = sbr.rel (%p118) target = $region16
      $region15: #{spatial_forward.4} parent=11 // pred_region
        _
      $region16: #{spatial_forward.4} parent=11 // pred_fallthru
        _
      // Predicated region
      $region17: #{spatial_forward.4} parent=11 // pred_check
        %p121 = pneg %p77
      $region18: #{spatial_forward.4} parent=11 // pred_check_branch
        %123 = sbr.rel (%p121) target = $region20
      $region19: #{spatial_forward.4} parent=11 // pred_region
        _
      $region20: #{spatial_forward.4} parent=11 // pred_fallthru
        _
    $region12: #{spatial_forward.4} parent=5 // pred_fallthru
      _
    %p124 = scmp.lt.s32.totalorder %s9, 2
    // Predicated region
    $region21: #{spatial_forward.4} parent=5 // pred_check
      %p125 = pneg %p124
    $region22: #{spatial_forward.4} parent=5 // pred_check_branch
      %127 = sbr.rel (%p125) target = $region24
    $region23: #{spatial_forward.4} parent=5 // pred_region
      // Predicated region
      $region25: #{spatial_forward.4} parent=23 // pred_check
        %p128 = pneg %p29
      $region26: #{spatial_forward.4} parent=23 // pred_check_branch
        %130 = sbr.rel (%p128) target = $region28
      $region27: #{spatial_forward.4} parent=23 // pred_region
        %s131 = smul.u32 32, %s9
        %p132 = scmp.lt.s32.totalorder %s131, 63
        %s133 = scalar_select %p132, %s131, 63
        %s134 = smul.addr %s133, 4
        %s135 = scalar_lea.vmem %s0, %s134
        %s136 = smul.u32 32, %s9
      $region28: #{spatial_forward.4} parent=23 // pred_fallthru
        _
    $region24: #{spatial_forward.4} parent=5 // pred_fallthru
      _
    %p137 = scmp.le.s32.totalorder 1, %s9
    %p138 = scmp.lt.s32.totalorder %s9, 3
    %p139 = pnand %p137, %p138
    %p140 = pneg %p139
    // Predicated region
    $region29: #{spatial_forward.4} parent=5 // pred_check
      _
    $region30: #{spatial_forward.4} parent=5 // pred_check_branch
      %142 = sbr.rel (%p139) target = $region32
    $region31: #{spatial_forward.4} parent=5 // pred_region
      %s143 = ssub.s32 %s9, 1
      %s144 = smul.u32 32, %s14
      %p145 = scmp.lt.s32.totalorder %s144, 63
      %s146 = scalar_select %p145, %s144, 63
      %s147 = smul.addr %s146, 4
      %s148 = scalar_lea.vmem %s0, %s147
      %p149 = pneg %p35
      %p150 = pneg %p32
      %p151 = pneg %p56
      %p152 = pneg %p53
      %p153 = pneg %p77
      %p154 = pneg %p74
      %p155 = pneg %p103
      %p156 = pneg %p100
      %s157 = smul.u32 32, %s14
      %p158 = scmp.lt.s32.totalorder %s157, 63
      %s159 = scalar_select %p158, %s157, 63
      %s160 = smul.addr %s159, 4
      %s161 = scalar_lea.vmem %s3, %s160
      %s162 = smul.u32 32, %s14
      %p163 = scmp.lt.s32.totalorder %s162, 63
      %s164 = scalar_select %p163, %s162, 63
      %s165 = smul.addr %s164, 4
      %s166 = scalar_lea.vmem %s0, %s165
      %s167 = smul.u32 32, %s14
      %s168 = smul.u32 32, %s14
      %p169 = scmp.lt.s32.totalorder %s168, 63
      %s170 = scalar_select %p169, %s168, 63
      %s171 = smul.addr %s170, 4
      %s172 = scalar_lea.vmem %s3, %s171
      %s173 = smul.u32 32, %s14
      %v175 = vld [vmem:[%s166] sm:$0xf]
      %v176 = vld [vmem:[%s166 + $0x4] sm:$0xf]
      %v177 = vld [vmem:[%s166 + $0x8] sm:$0xf]
      %v178 = vld [vmem:[%s166 + $0xc] sm:$0xf]
      %v179 = vld [vmem:[%s166 + $0x10] sm:$0xf]
      %v180 = vld [vmem:[%s166 + $0x14] sm:$0xf]
      %v181 = vld [vmem:[%s166 + $0x18] sm:$0xf]
      %v182 = vld [vmem:[%s166 + $0x1c] sm:$0xf]
      %v183 = vld [vmem:[%s166 + $0x20] sm:$0xf]
      %v184 = vld [vmem:[%s166 + $0x24] sm:$0xf]
      %v185 = vld [vmem:[%s166 + $0x28] sm:$0xf]
      %v186 = vld [vmem:[%s166 + $0x2c] sm:$0xf]
      %v187 = vld [vmem:[%s166 + $0x30] sm:$0xf]
      %v188 = vld [vmem:[%s166 + $0x34] sm:$0xf]
      %v189 = vld [vmem:[%s166 + $0x38] sm:$0xf]
      %v190 = vld [vmem:[%s166 + $0x3c] sm:$0xf]
      %v191 = vld [vmem:[%s166 + $0x40] sm:$0xf]
      %v192 = vld [vmem:[%s166 + $0x44] sm:$0xf]
      %v193 = vld [vmem:[%s166 + $0x48] sm:$0xf]
      %v194 = vld [vmem:[%s166 + $0x4c] sm:$0xf]
      %v195 = vld [vmem:[%s166 + $0x50] sm:$0xf]
      %v196 = vld [vmem:[%s166 + $0x54] sm:$0xf]
      %v197 = vld [vmem:[%s166 + $0x58] sm:$0xf]
      %v198 = vld [vmem:[%s166 + $0x5c] sm:$0xf]
      %v199 = vld [vmem:[%s166 + $0x60] sm:$0xf]
      %v200 = vld [vmem:[%s166 + $0x64] sm:$0xf]
      %v201 = vld [vmem:[%s166 + $0x68] sm:$0xf]
      %v202 = vld [vmem:[%s166 + $0x6c] sm:$0xf]
      %v203 = vld [vmem:[%s166 + $0x70] sm:$0xf]
      %v204 = vld [vmem:[%s166 + $0x74] sm:$0xf]
      %v205 = vld [vmem:[%s166 + $0x78] sm:$0xf]
      %v206 = vld [vmem:[%s166 + $0x7c] sm:$0xf]
      %v207 = vld [vmem:[%s1] sm:$0xf]
      %v208 = vld [vmem:[%s1 + $0x4] sm:$0xf]
      %v209 = vld [vmem:[%s1 + $0x8] sm:$0xf]
      %v210 = vld [vmem:[%s1 + $0xc] sm:$0xf]
      %v211 = vld [vmem:[%s1 + $0x10] sm:$0x3]
      %v212 = vld [vmem:[%s2] sm:$0x1]
      %v214 = vlaneseq
      %v215 = vshrl.u32 %v214, 7
      %v216 = vsub.s32 0, %v215
      %v217 = vrot.slane %v212, %v216
      %v251 = vunpack.c.l.b16 %v175
      %v252 = vunpack.c.l.b16 %v176
      %v253 = vunpack.c.l.b16 %v177
      %v254 = vunpack.c.l.b16 %v178
      %v255 = vunpack.c.l.b16 %v179
      %v256 = vunpack.c.l.b16 %v180
      %v257 = vunpack.c.l.b16 %v181
      %v258 = vunpack.c.l.b16 %v182
      %v259 = vunpack.c.l.b16 %v183
      %v260 = vunpack.c.l.b16 %v184
      %v261 = vunpack.c.l.b16 %v185
      %v262 = vunpack.c.l.b16 %v186
      %v263 = vunpack.c.l.b16 %v187
      %v264 = vunpack.c.l.b16 %v188
      %v265 = vunpack.c.l.b16 %v189
      %v266 = vunpack.c.l.b16 %v190
      %v267 = vunpack.c.l.b16 %v191
      %v268 = vunpack.c.l.b16 %v192
      %v269 = vunpack.c.l.b16 %v193
      %v270 = vunpack.c.l.b16 %v194
      %v271 = vunpack.c.l.b16 %v195
      %v272 = vunpack.c.l.b16 %v196
      %v273 = vunpack.c.l.b16 %v197
      %v274 = vunpack.c.l.b16 %v198
      %v275 = vunpack.c.l.b16 %v199
      %v276 = vunpack.c.l.b16 %v200
      %v277 = vunpack.c.l.b16 %v201
      %v278 = vunpack.c.l.b16 %v202
      %v279 = vunpack.c.l.b16 %v203
      %v280 = vunpack.c.l.b16 %v204
      %v281 = vunpack.c.l.b16 %v205
      %v282 = vunpack.c.l.b16 %v206
      %v283 = vpack.c.b16 %v252, %v251
      %v284 = vpack.c.b16 %v254, %v253
      %v285 = vpack.c.b16 %v256, %v255
      %v286 = vpack.c.b16 %v258, %v257
      %v287 = vpack.c.b16 %v260, %v259
      %v288 = vpack.c.b16 %v262, %v261
      %v289 = vpack.c.b16 %v264, %v263
      %v290 = vpack.c.b16 %v266, %v265
      %v291 = vpack.c.b16 %v268, %v267
      %v292 = vpack.c.b16 %v270, %v269
      %v293 = vpack.c.b16 %v272, %v271
      %v294 = vpack.c.b16 %v274, %v273
      %v295 = vpack.c.b16 %v276, %v275
      %v296 = vpack.c.b16 %v278, %v277
      %v297 = vpack.c.b16 %v280, %v279
      %v298 = vpack.c.b16 %v282, %v281
      %v304 = vunpack.c.l.b16 %v207
      %v305 = vunpack.c.l.b16 %v208
      %v306 = vunpack.c.l.b16 %v209
      %v307 = vunpack.c.l.b16 %v210
      %v308 = vunpack.c.l.b16 %v211
      %v309 = vpack.c.b16 %v305, %v304
      %v310 = vpack.c.b16 %v307, %v306
      %v311 = vpack.c.b16 %v308, %v308
      %vm314 = vcmask 293888
      %v316 = vsel %vm314, %v283, 0
      %v319 = vsel %vm314, %v284, 0
      %v322 = vsel %vm314, %v285, 0
      %v325 = vsel %vm314, %v286, 0
      %v328 = vsel %vm314, %v287, 0
      %v331 = vsel %vm314, %v288, 0
      %v334 = vsel %vm314, %v289, 0
      %v337 = vsel %vm314, %v290, 0
      %v340 = vsel %vm314, %v291, 0
      %v343 = vsel %vm314, %v292, 0
      %v346 = vsel %vm314, %v293, 0
      %v349 = vsel %vm314, %v294, 0
      %v352 = vsel %vm314, %v295, 0
      %v355 = vsel %vm314, %v296, 0
      %v358 = vsel %vm314, %v297, 0
      %v361 = vsel %vm314, %v298, 0
      %vm363 = vcmask 1041408
      %v365 = vsel %vm363, %v311, 0
      %367 = vmatprep.subr.bf16.mxu0 0
      %368 = vmatpush1.bf16.msra.mxu0 %v309
      %369 = vmatprep.subr.bf16.mxu0 0
      %370 = vmatpush1.bf16.msra.mxu0 %v310
      %371 = vmatprep.subr.bf16.mxu0 0
      %372 = vmatpush1.bf16.msra.mxu0 %v365
      %373 = vmatprep.subr.bf16.mxu0 0
      %374 = vmatpush1.bf16.msra.mxu0 0
      %375 = vmatprep.subr.bf16.mxu0 0
      %376 = vmatpush1.bf16.msra.mxu0 0
      %377 = vmatprep.subr.bf16.mxu0 0
      %378 = vmatpush1.bf16.msra.mxu0 0
      %379 = vmatprep.subr.bf16.mxu0 0
      %380 = vmatpush1.bf16.msra.mxu0 0
      %381 = vmatprep.subr.bf16.mxu0 0
      %382 = vmatpush1.bf16.msra.mxu0 0
      %383 = vmatprep.subr.bf16.mxu0 0
      %384 = vmatpush1.bf16.msra.mxu0 0
      %385 = vmatprep.subr.bf16.mxu0 0
      %386 = vmatpush1.bf16.msra.mxu0 0
      %387 = vmatprep.subr.bf16.mxu0 0
      %388 = vmatpush1.bf16.msra.mxu0 0
      %389 = vmatprep.subr.bf16.mxu0 0
      %390 = vmatpush1.bf16.msra.mxu0 0
      %391 = vmatprep.subr.bf16.mxu0 0
      %392 = vmatpush1.bf16.msra.mxu0 0
      %393 = vmatprep.subr.bf16.mxu0 0
      %394 = vmatpush1.bf16.msra.mxu0 0
      %395 = vmatprep.subr.bf16.mxu0 0
      %396 = vmatpush1.bf16.msra.mxu0 0
      %397 = vmatprep.subr.bf16.mxu0 0
      %398 = vmatpush1.bf16.msra.mxu0 0
      %399 = vmatprep.mubr.bf16.mxu0 0
      %400 = vmatmul.mubr.bf16.gmra.mrb[0].mxu0 %v316
      %v401 = vpop.f32.mrb[0].mxu0
      %v402 = vadd.f32 %v217, %v401
      %v403 = vpop.f32.mrb[0].mxu0
      %v404 = vpop.f32.mrb[0].mxu0
      %v405 = vadd.f32 %v217, %v404
      %v406 = vpop.f32.mrb[0].mxu0
      %407 = vmatprep.mubr.bf16.mxu0 0
      %408 = vmatmul.mubr.bf16.gmra.mrb[0].mxu0 %v319
      %v409 = vpop.f32.mrb[0].mxu0
      %v410 = vadd.f32 %v217, %v409
      %v411 = vpop.f32.mrb[0].mxu0
      %v412 = vpop.f32.mrb[0].mxu0
      %v413 = vadd.f32 %v217, %v412
      %v414 = vpop.f32.mrb[0].mxu0
      %415 = vmatprep.mubr.bf16.mxu0 0
      %416 = vmatmul.mubr.bf16.gmra.mrb[0].mxu0 %v322
      %v417 = vpop.f32.mrb[0].mxu0
      %v418 = vadd.f32 %v217, %v417
      %v419 = vpop.f32.mrb[0].mxu0
      %v420 = vpop.f32.mrb[0].mxu0
      %v421 = vadd.f32 %v217, %v420
      %v422 = vpop.f32.mrb[0].mxu0
      %423 = vmatprep.mubr.bf16.mxu0 0
      %424 = vmatmul.mubr.bf16.gmra.mrb[0].mxu0 %v325
      %v425 = vpop.f32.mrb[0].mxu0
      %v426 = vadd.f32 %v217, %v425
      %v427 = vpop.f32.mrb[0].mxu0
      %v428 = vpop.f32.mrb[0].mxu0
      %v429 = vadd.f32 %v217, %v428
      %v430 = vpop.f32.mrb[0].mxu0
      %431 = vmatprep.mubr.bf16.mxu0 0
      %432 = vmatmul.mubr.bf16.gmra.mrb[0].mxu0 %v328
      %v433 = vpop.f32.mrb[0].mxu0
      %v434 = vadd.f32 %v217, %v433
      %v435 = vpop.f32.mrb[0].mxu0
      %v436 = vpop.f32.mrb[0].mxu0
      %v437 = vadd.f32 %v217, %v436
      %v438 = vpop.f32.mrb[0].mxu0
      %439 = vmatprep.mubr.bf16.mxu0 0
      %440 = vmatmul.mubr.bf16.gmra.mrb[0].mxu0 %v331
      %v441 = vpop.f32.mrb[0].mxu0
      %v442 = vadd.f32 %v217, %v441
      %v443 = vpop.f32.mrb[0].mxu0
      %v444 = vpop.f32.mrb[0].mxu0
      %v445 = vadd.f32 %v217, %v444
      %v446 = vpop.f32.mrb[0].mxu0
      %447 = vmatprep.mubr.bf16.mxu0 0
      %448 = vmatmul.mubr.bf16.gmra.mrb[0].mxu0 %v334
      %v449 = vpop.f32.mrb[0].mxu0
      %v450 = vadd.f32 %v217, %v449
      %v451 = vpop.f32.mrb[0].mxu0
      %v452 = vpop.f32.mrb[0].mxu0
      %v453 = vadd.f32 %v217, %v452
      %v454 = vpop.f32.mrb[0].mxu0
      %455 = vmatprep.mubr.bf16.mxu0 0
      %456 = vmatmul.mubr.bf16.gmra.mrb[0].mxu0 %v337
      %v457 = vpop.f32.mrb[0].mxu0
      %v458 = vadd.f32 %v217, %v457
      %v459 = vpop.f32.mrb[0].mxu0
      %v460 = vpop.f32.mrb[0].mxu0
      %v461 = vadd.f32 %v217, %v460
      %v462 = vpop.f32.mrb[0].mxu0
      %463 = vmatprep.mubr.bf16.mxu0 0
      %464 = vmatmul.mubr.bf16.gmra.mrb[0].mxu0 %v340
      %v465 = vpop.f32.mrb[0].mxu0
      %v466 = vadd.f32 %v217, %v465
      %v467 = vpop.f32.mrb[0].mxu0
      %v468 = vpop.f32.mrb[0].mxu0
      %v469 = vadd.f32 %v217, %v468
      %v470 = vpop.f32.mrb[0].mxu0
      %471 = vmatprep.mubr.bf16.mxu0 0
      %472 = vmatmul.mubr.bf16.gmra.mrb[0].mxu0 %v343
      %v473 = vpop.f32.mrb[0].mxu0
      %v474 = vadd.f32 %v217, %v473
      %v475 = vpop.f32.mrb[0].mxu0
      %v476 = vpop.f32.mrb[0].mxu0
      %v477 = vadd.f32 %v217, %v476
      %v478 = vpop.f32.mrb[0].mxu0
      %479 = vmatprep.mubr.bf16.mxu0 0
      %480 = vmatmul.mubr.bf16.gmra.mrb[0].mxu0 %v346
      %v481 = vpop.f32.mrb[0].mxu0
      %v482 = vadd.f32 %v217, %v481
      %v483 = vpop.f32.mrb[0].mxu0
      %v484 = vpop.f32.mrb[0].mxu0
      %v485 = vadd.f32 %v217, %v484
      %v486 = vpop.f32.mrb[0].mxu0
      %487 = vmatprep.mubr.bf16.mxu0 0
      %488 = vmatmul.mubr.bf16.gmra.mrb[0].mxu0 %v349
      %v489 = vpop.f32.mrb[0].mxu0
      %v490 = vadd.f32 %v217, %v489
      %v491 = vpop.f32.mrb[0].mxu0
      %v492 = vpop.f32.mrb[0].mxu0
      %v493 = vadd.f32 %v217, %v492
      %v494 = vpop.f32.mrb[0].mxu0
      %495 = vmatprep.mubr.bf16.mxu0 0
      %496 = vmatmul.mubr.bf16.gmra.mrb[0].mxu0 %v352
      %v497 = vpop.f32.mrb[0].mxu0
      %v498 = vadd.f32 %v217, %v497
      %v499 = vpop.f32.mrb[0].mxu0
      %v500 = vpop.f32.mrb[0].mxu0
      %v501 = vadd.f32 %v217, %v500
      %v502 = vpop.f32.mrb[0].mxu0
      %503 = vmatprep.mubr.bf16.mxu0 0
      %504 = vmatmul.mubr.bf16.gmra.mrb[0].mxu0 %v355
      %v505 = vpop.f32.mrb[0].mxu0
      %v506 = vadd.f32 %v217, %v505
      %v507 = vpop.f32.mrb[0].mxu0
      %v508 = vpop.f32.mrb[0].mxu0
      %v509 = vadd.f32 %v217, %v508
      %v510 = vpop.f32.mrb[0].mxu0
      %511 = vmatprep.mubr.bf16.mxu0 0
      %512 = vmatmul.mubr.bf16.gmra.mrb[0].mxu0 %v358
      %v513 = vpop.f32.mrb[0].mxu0
      %v514 = vadd.f32 %v217, %v513
      %v515 = vpop.f32.mrb[0].mxu0
      %v516 = vpop.f32.mrb[0].mxu0
      %v517 = vadd.f32 %v217, %v516
      %v518 = vpop.f32.mrb[0].mxu0
      %519 = vmatprep.mubr.bf16.mxu0 0
      %520 = vmatmul.mubr.bf16.gmra.mrb[0].mxu0 %v361
      %v521 = vpop.f32.mrb[0].mxu0
      %v522 = vadd.f32 %v217, %v521
      %v523 = vpop.f32.mrb[0].mxu0
      %v524 = vpop.f32.mrb[0].mxu0
      %v525 = vadd.f32 %v217, %v524
      %v526 = vpop.f32.mrb[0].mxu0
      %527 = vdwg.mxu0
      %v528 = vmax.f32 %v402, 0.0
      %v529 = vmax.f32 %v405, 0.0
      %v530 = vmax.f32 %v410, 0.0
      %v531 = vmax.f32 %v413, 0.0
      %v532 = vmax.f32 %v418, 0.0
      %v533 = vmax.f32 %v421, 0.0
      %v534 = vmax.f32 %v426, 0.0
      %v535 = vmax.f32 %v429, 0.0
      %v536 = vmax.f32 %v434, 0.0
      %v537 = vmax.f32 %v437, 0.0
      %v538 = vmax.f32 %v442, 0.0
      %v539 = vmax.f32 %v445, 0.0
      %v540 = vmax.f32 %v450, 0.0
      %v541 = vmax.f32 %v453, 0.0
      %v542 = vmax.f32 %v458, 0.0
      %v543 = vmax.f32 %v461, 0.0
      %v544 = vmax.f32 %v466, 0.0
      %v545 = vmax.f32 %v469, 0.0
      %v546 = vmax.f32 %v474, 0.0
      %v547 = vmax.f32 %v477, 0.0
      %v548 = vmax.f32 %v482, 0.0
      %v549 = vmax.f32 %v485, 0.0
      %v550 = vmax.f32 %v490, 0.0
      %v551 = vmax.f32 %v493, 0.0
      %v552 = vmax.f32 %v498, 0.0
      %v553 = vmax.f32 %v501, 0.0
      %v554 = vmax.f32 %v506, 0.0
      %v555 = vmax.f32 %v509, 0.0
      %v556 = vmax.f32 %v514, 0.0
      %v557 = vmax.f32 %v517, 0.0
      %v558 = vmax.f32 %v522, 0.0
      %v559 = vmax.f32 %v525, 0.0
      %v560 = vpack.c.bf16 %v529, %v528
      %v561 = vpack.c.bf16 %v531, %v530
      %v562 = vpack.c.bf16 %v533, %v532
      %v563 = vpack.c.bf16 %v535, %v534
      %v564 = vpack.c.bf16 %v537, %v536
      %v565 = vpack.c.bf16 %v539, %v538
      %v566 = vpack.c.bf16 %v541, %v540
      %v567 = vpack.c.bf16 %v543, %v542
      %v568 = vpack.c.bf16 %v545, %v544
      %v569 = vpack.c.bf16 %v547, %v546
      %v570 = vpack.c.bf16 %v549, %v548
      %v571 = vpack.c.bf16 %v551, %v550
      %v572 = vpack.c.bf16 %v553, %v552
      %v573 = vpack.c.bf16 %v555, %v554
      %v574 = vpack.c.bf16 %v557, %v556
      %v575 = vpack.c.bf16 %v559, %v558
      %v592 = vunpack.c.l.b16 %v560
      %v593 = vunpack.c.h.b16 %v560
      %v594 = vunpack.c.l.b16 %v561
      %v595 = vunpack.c.h.b16 %v561
      %v596 = vunpack.c.l.b16 %v562
      %v597 = vunpack.c.h.b16 %v562
      %v598 = vunpack.c.l.b16 %v563
      %v599 = vunpack.c.h.b16 %v563
      %v600 = vunpack.c.l.b16 %v564
      %v601 = vunpack.c.h.b16 %v564
      %v602 = vunpack.c.l.b16 %v565
      %v603 = vunpack.c.h.b16 %v565
      %v604 = vunpack.c.l.b16 %v566
      %v605 = vunpack.c.h.b16 %v566
      %v606 = vunpack.c.l.b16 %v567
      %v607 = vunpack.c.h.b16 %v567
      %v608 = vunpack.c.l.b16 %v568
      %v609 = vunpack.c.h.b16 %v568
      %v610 = vunpack.c.l.b16 %v569
      %v611 = vunpack.c.h.b16 %v569
      %v612 = vunpack.c.l.b16 %v570
      %v613 = vunpack.c.h.b16 %v570
      %v614 = vunpack.c.l.b16 %v571
      %v615 = vunpack.c.h.b16 %v571
      %v616 = vunpack.c.l.b16 %v572
      %v617 = vunpack.c.h.b16 %v572
      %v618 = vunpack.c.l.b16 %v573
      %v619 = vunpack.c.h.b16 %v573
      %v620 = vunpack.c.l.b16 %v574
      %v621 = vunpack.c.h.b16 %v574
      %v622 = vunpack.c.l.b16 %v575
      %v623 = vunpack.c.h.b16 %v575
      %v624 = vpack.c.b16 %v592, %v592
      %v625 = vpack.c.b16 %v593, %v593
      %v626 = vpack.c.b16 %v594, %v594
      %v627 = vpack.c.b16 %v595, %v595
      %v628 = vpack.c.b16 %v596, %v596
      %v629 = vpack.c.b16 %v597, %v597
      %v630 = vpack.c.b16 %v598, %v598
      %v631 = vpack.c.b16 %v599, %v599
      %v632 = vpack.c.b16 %v600, %v600
      %v633 = vpack.c.b16 %v601, %v601
      %v634 = vpack.c.b16 %v602, %v602
      %v635 = vpack.c.b16 %v603, %v603
      %v636 = vpack.c.b16 %v604, %v604
      %v637 = vpack.c.b16 %v605, %v605
      %v638 = vpack.c.b16 %v606, %v606
      %v639 = vpack.c.b16 %v607, %v607
      %v640 = vpack.c.b16 %v608, %v608
      %v641 = vpack.c.b16 %v609, %v609
      %v642 = vpack.c.b16 %v610, %v610
      %v643 = vpack.c.b16 %v611, %v611
      %v644 = vpack.c.b16 %v612, %v612
      %v645 = vpack.c.b16 %v613, %v613
      %v646 = vpack.c.b16 %v614, %v614
      %v647 = vpack.c.b16 %v615, %v615
      %v648 = vpack.c.b16 %v616, %v616
      %v649 = vpack.c.b16 %v617, %v617
      %v650 = vpack.c.b16 %v618, %v618
      %v651 = vpack.c.b16 %v619, %v619
      %v652 = vpack.c.b16 %v620, %v620
      %v653 = vpack.c.b16 %v621, %v621
      %v654 = vpack.c.b16 %v622, %v622
      %v655 = vpack.c.b16 %v623, %v623
      %688 = vst [vmem:[%s172] sm:$0xf] %v624
      %689 = vst [vmem:[%s172 + $0x4] sm:$0xf] %v625
      %690 = vst [vmem:[%s172 + $0x8] sm:$0xf] %v626
      %691 = vst [vmem:[%s172 + $0xc] sm:$0xf] %v627
      %692 = vst [vmem:[%s172 + $0x10] sm:$0xf] %v628
      %693 = vst [vmem:[%s172 + $0x14] sm:$0xf] %v629
      %694 = vst [vmem:[%s172 + $0x18] sm:$0xf] %v630
      %695 = vst [vmem:[%s172 + $0x1c] sm:$0xf] %v631
      %696 = vst [vmem:[%s172 + $0x20] sm:$0xf] %v632
      %697 = vst [vmem:[%s172 + $0x24] sm:$0xf] %v633
      %698 = vst [vmem:[%s172 + $0x28] sm:$0xf] %v634
      %699 = vst [vmem:[%s172 + $0x2c] sm:$0xf] %v635
      %700 = vst [vmem:[%s172 + $0x30] sm:$0xf] %v636
      %701 = vst [vmem:[%s172 + $0x34] sm:$0xf] %v637
      %702 = vst [vmem:[%s172 + $0x38] sm:$0xf] %v638
      %703 = vst [vmem:[%s172 + $0x3c] sm:$0xf] %v639
      %704 = vst [vmem:[%s172 + $0x40] sm:$0xf] %v640
      %705 = vst [vmem:[%s172 + $0x44] sm:$0xf] %v641
      %706 = vst [vmem:[%s172 + $0x48] sm:$0xf] %v642
      %707 = vst [vmem:[%s172 + $0x4c] sm:$0xf] %v643
      %708 = vst [vmem:[%s172 + $0x50] sm:$0xf] %v644
      %709 = vst [vmem:[%s172 + $0x54] sm:$0xf] %v645
      %710 = vst [vmem:[%s172 + $0x58] sm:$0xf] %v646
      %711 = vst [vmem:[%s172 + $0x5c] sm:$0xf] %v647
      %712 = vst [vmem:[%s172 + $0x60] sm:$0xf] %v648
      %713 = vst [vmem:[%s172 + $0x64] sm:$0xf] %v649
      %714 = vst [vmem:[%s172 + $0x68] sm:$0xf] %v650
      %715 = vst [vmem:[%s172 + $0x6c] sm:$0xf] %v651
      %716 = vst [vmem:[%s172 + $0x70] sm:$0xf] %v652
      %717 = vst [vmem:[%s172 + $0x74] sm:$0xf] %v653
      %718 = vst [vmem:[%s172 + $0x78] sm:$0xf] %v654
      %719 = vst [vmem:[%s172 + $0x7c] sm:$0xf] %v655
      %s720 = smul.u32 32, %s14
      %p721 = scmp.lt.s32.totalorder %s720, 63
      %s722 = scalar_select %p721, %s720, 63
      %s723 = smul.addr %s722, 4
      %s724 = scalar_lea.vmem %s3, %s723
      // Predicated region
      $region33: #{spatial_forward.4} parent=31 // pred_check
        %p725 = pneg %p100
      $region34: #{spatial_forward.4} parent=31 // pred_check_branch
        %727 = sbr.rel (%p725) target = $region36
      $region35: #{spatial_forward.4} parent=31 // pred_region
        %s728 = smul.u32 32, %s14
      $region36: #{spatial_forward.4} parent=31 // pred_fallthru
        _
    $region32: #{spatial_forward.4} parent=5 // pred_fallthru
      _
    %p729 = scmp.le.s32.totalorder 2, %s9
    // Predicated region
    $region37: #{spatial_forward.4} parent=5 // pred_check
      %p730 = pneg %p729
    $region38: #{spatial_forward.4} parent=5 // pred_check_branch
      %732 = sbr.rel (%p730) target = $region40
    $region39: #{spatial_forward.4} parent=5 // pred_region
      %s733 = ssub.s32 %s9, 2
      // Predicated region
      $region41: #{spatial_forward.4} parent=39 // pred_check
        %p734 = pneg %p106
      $region42: #{spatial_forward.4} parent=39 // pred_check_branch
        %736 = sbr.rel (%p734) target = $region44
      $region43: #{spatial_forward.4} parent=39 // pred_region
        %s737 = smul.u32 32, %s15
        %p738 = scmp.lt.s32.totalorder %s737, 63
        %s739 = scalar_select %p738, %s737, 63
        %s740 = smul.addr %s739, 4
        %s741 = scalar_lea.vmem %s3, %s740
      $region44: #{spatial_forward.4} parent=39 // pred_fallthru
        _
    $region40: #{spatial_forward.4} parent=5 // pred_fallthru
      _
  $region6: #{spatial_forward.4} parent=0 // loop_footer
    %s13 = sadd.s32 1, %s9
  $region7: #{spatial_forward.4} parent=0 // loop_footer_branch
    %8 = sbr.rel target = $region3
  $region8: #{spatial_forward.4} parent=0 // loop_exit
    _

// kernel: spatial_forward.5
$region0: #{spatial_forward.5}
  #allocation0 [shape = 'u32[]', space=smem, size = 0x4, offset = 0x4, fixed_abs, tag = 'smem constant byte address 0x4 - core index']
  #allocation1 [shape = 'u32[144,128]{1,0:T(1,128)}', space=vmem, size = 0x12000, scoped, tag = 'internal scratch']
  %s0 = inlined_call_operand.vmem [shape: bf16[32,72], index: 0, kind: input, shape index: {}]
  %s1 = inlined_call_operand.vmem [shape: bf16[72,128], index: 1, kind: input, shape index: {}]
  %s2 = inlined_call_operand.vmem [shape: f32[1,128], index: 2, kind: input, shape index: {}]
  %s3 = inlined_call_operand.vmem [shape: bf16[32,128], index: 3, kind: output, shape index: {}]
  %s4 = sld [smem:[#allocation0]]
  $region22: #{spatial_forward.5} parent=0
    _
  %s6 = ssub.s32 1, %s4
  %s7 = scalar_select 0, %s6, %s4
  // Predicated region
  $region2: #{spatial_forward.5} parent=0 // pred_check
    _
  $region3: #{spatial_forward.5} parent=0 // pred_check_branch
    %9 = sbr.rel (0) target = $region5
  $region4: #{spatial_forward.5} parent=0 // pred_region
    _
  $region5: #{spatial_forward.5} parent=0 // pred_fallthru
    _
  // Predicated region
  $region6: #{spatial_forward.5} parent=0 // pred_check
    _
  $region7: #{spatial_forward.5} parent=0 // pred_check_branch
    %11 = sbr.rel (0) target = $region9
  $region8: #{spatial_forward.5} parent=0 // pred_region
    _
  $region9: #{spatial_forward.5} parent=0 // pred_fallthru
    _
  // Predicated region
  $region10: #{spatial_forward.5} parent=0 // pred_check
    _
  $region11: #{spatial_forward.5} parent=0 // pred_check_branch
    %13 = sbr.rel (0) target = $region13
  $region12: #{spatial_forward.5} parent=0 // pred_region
    _
  $region13: #{spatial_forward.5} parent=0 // pred_fallthru
    _
  %v15 = vld [vmem:[%s0] sm:$0xf]
  %v16 = vld [vmem:[%s0 + $0x4] sm:$0xf]
  %v17 = vld [vmem:[%s0 + $0x8] sm:$0xf]
  %v18 = vld [vmem:[%s0 + $0xc] sm:$0xf]
  %v19 = vld [vmem:[%s1] sm:$0xf]
  %v20 = vld [vmem:[%s1 + $0x4] sm:$0xf]
  %v21 = vld [vmem:[%s1 + $0x8] sm:$0xf]
  %v22 = vld [vmem:[%s1 + $0xc] sm:$0xf]
  %v23 = vld [vmem:[%s1 + $0x10] sm:$0xf]
  %v24 = vld [vmem:[%s1 + $0x14] sm:$0xf]
  %v25 = vld [vmem:[%s1 + $0x18] sm:$0xf]
  %v26 = vld [vmem:[%s1 + $0x1c] sm:$0xf]
  %v27 = vld [vmem:[%s1 + $0x20] sm:$0xf]
  %v28 = vld [vmem:[%s2] sm:$0x1]
  %v30 = vlaneseq
  %v31 = vshrl.u32 %v30, 7
  %v32 = vsub.s32 0, %v31
  %v33 = vrot.slane %v28, %v32
  %v39 = vunpack.c.l.b16 %v15
  %v40 = vunpack.c.l.b16 %v16
  %v41 = vunpack.c.l.b16 %v17
  %v42 = vunpack.c.l.b16 %v18
  %v43 = vpack.c.b16 %v40, %v39
  %v44 = vpack.c.b16 %v42, %v41
  %v54 = vunpack.c.l.b16 %v19
  %v55 = vunpack.c.l.b16 %v20
  %v56 = vunpack.c.l.b16 %v21
  %v57 = vunpack.c.l.b16 %v22
  %v58 = vunpack.c.l.b16 %v23
  %v59 = vunpack.c.l.b16 %v24
  %v60 = vunpack.c.l.b16 %v25
  %v61 = vunpack.c.l.b16 %v26
  %v62 = vunpack.c.l.b16 %v27
  %v63 = vpack.c.b16 %v55, %v54
  %v64 = vpack.c.b16 %v57, %v56
  %v65 = vpack.c.b16 %v59, %v58
  %v66 = vpack.c.b16 %v61, %v60
  %v67 = vpack.c.b16 %v62, %v62
  %vm72 = vcmask 588800
  %v74 = vsel %vm72, %v43, 0
  %v77 = vsel %vm72, %v44, 0
  %vm79 = vcmask 1043456
  %v81 = vsel %vm79, %v67, 0
  %83 = vmatprep.subr.bf16.mxu0 0
  %84 = vmatpush1.bf16.msra.mxu0 %v63
  %85 = vmatprep.subr.bf16.mxu0 0
  %86 = vmatpush1.bf16.msra.mxu0 %v64
  %87 = vmatprep.subr.bf16.mxu0 0
  %88 = vmatpush1.bf16.msra.mxu0 %v65
  %89 = vmatprep.subr.bf16.mxu0 0
  %90 = vmatpush1.bf16.msra.mxu0 %v66
  %91 = vmatprep.subr.bf16.mxu0 0
  %92 = vmatpush1.bf16.msra.mxu0 %v81
  %93 = vmatprep.subr.bf16.mxu0 0
  %94 = vmatpush1.bf16.msra.mxu0 0
  %95 = vmatprep.subr.bf16.mxu0 0
  %96 = vmatpush1.bf16.msra.mxu0 0
  %97 = vmatprep.subr.bf16.mxu0 0
  %98 = vmatpush1.bf16.msra.mxu0 0
  %99 = vmatprep.subr.bf16.mxu0 0
  %100 = vmatpush1.bf16.msra.mxu0 0
  %101 = vmatprep.subr.bf16.mxu0 0
  %102 = vmatpush1.bf16.msra.mxu0 0
  %103 = vmatprep.subr.bf16.mxu0 0
  %104 = vmatpush1.bf16.msra.mxu0 0
  %105 = vmatprep.subr.bf16.mxu0 0
  %106 = vmatpush1.bf16.msra.mxu0 0
  %107 = vmatprep.subr.bf16.mxu0 0
  %108 = vmatpush1.bf16.msra.mxu0 0
  %109 = vmatprep.subr.bf16.mxu0 0
  %110 = vmatpush1.bf16.msra.mxu0 0
  %111 = vmatprep.subr.bf16.mxu0 0
  %112 = vmatpush1.bf16.msra.mxu0 0
  %113 = vmatprep.subr.bf16.mxu0 0
  %114 = vmatpush1.bf16.msra.mxu0 0
  %115 = vmatprep.mubr.bf16.mxu0 0
  %116 = vmatmul.mubr.bf16.gmra.mrb[0].mxu0 %v74
  %v117 = vpop.f32.mrb[0].mxu0
  %v118 = vadd.f32 %v33, %v117
  %v119 = vpop.f32.mrb[0].mxu0
  %v120 = vpop.f32.mrb[0].mxu0
  %v121 = vadd.f32 %v33, %v120
  %v122 = vpop.f32.mrb[0].mxu0
  %123 = vmatprep.mubr.bf16.mxu0 0
  %124 = vmatmul.mubr.bf16.gmra.mrb[0].mxu0 %v77
  %v125 = vpop.f32.mrb[0].mxu0
  %v126 = vadd.f32 %v33, %v125
  %v127 = vpop.f32.mrb[0].mxu0
  %v128 = vpop.f32.mrb[0].mxu0
  %v129 = vadd.f32 %v33, %v128
  %v130 = vpop.f32.mrb[0].mxu0
  %131 = vdwg.mxu0
  %v132 = vmax.f32 %v118, 0.0
  %v133 = vmax.f32 %v121, 0.0
  %v134 = vmax.f32 %v126, 0.0
  %v135 = vmax.f32 %v129, 0.0
  %v136 = vpack.c.bf16 %v133, %v132
  %v137 = vpack.c.bf16 %v135, %v134
  %v140 = vunpack.c.l.b16 %v136
  %v141 = vunpack.c.h.b16 %v136
  %v142 = vunpack.c.l.b16 %v137
  %v143 = vunpack.c.h.b16 %v137
  %v144 = vpack.c.b16 %v140, %v140
  %v145 = vpack.c.b16 %v141, %v141
  %v146 = vpack.c.b16 %v142, %v142
  %v147 = vpack.c.b16 %v143, %v143
  %152 = vst [vmem:[%s3] sm:$0xf] %v144
  %153 = vst [vmem:[%s3 + $0x4] sm:$0xf] %v145
  %154 = vst [vmem:[%s3 + $0x8] sm:$0xf] %v146
  %155 = vst [vmem:[%s3 + $0xc] sm:$0xf] %v147
  // Predicated region
  $region14: #{spatial_forward.5} parent=0 // pred_check
    _
  $region15: #{spatial_forward.5} parent=0 // pred_check_branch
    %157 = sbr.rel (0) target = $region17
  $region16: #{spatial_forward.5} parent=0 // pred_region
    _
  $region17: #{spatial_forward.5} parent=0 // pred_fallthru
    _
  // Predicated region
  $region18: #{spatial_forward.5} parent=0 // pred_check
    _
  $region19: #{spatial_forward.5} parent=0 // pred_check_branch
    %159 = sbr.rel (0) target = $region21
  $region20: #{spatial_forward.5} parent=0 // pred_region
    _
  $region21: #{spatial_forward.5} parent=0 // pred_fallthru
    _

// kernel: spatial_forward.6
$region0: #{spatial_forward.6}
  #allocation0 [shape = 'u32[]', space=smem, size = 0x4, offset = 0x4, fixed_abs, tag = 'smem constant byte address 0x4 - core index']
  #allocation1 [shape = 'u32[144,128]{1,0:T(1,128)}', space=vmem, size = 0x12000, scoped, tag = 'internal scratch']
  %s0 = inlined_call_operand.vmem [shape: bf16[8,72], index: 0, kind: input, shape index: {}]
  %s1 = inlined_call_operand.vmem [shape: bf16[72,128], index: 1, kind: input, shape index: {}]
  %s2 = inlined_call_operand.vmem [shape: f32[1,128], index: 2, kind: input, shape index: {}]
  %s3 = inlined_call_operand.vmem [shape: bf16[8,128], index: 3, kind: output, shape index: {}]
  %s4 = sld [smem:[#allocation0]]
  $region22: #{spatial_forward.6} parent=0
    _
  %s6 = ssub.s32 1, %s4
  %s7 = scalar_select 0, %s6, %s4
  // Predicated region
  $region2: #{spatial_forward.6} parent=0 // pred_check
    _
  $region3: #{spatial_forward.6} parent=0 // pred_check_branch
    %9 = sbr.rel (0) target = $region5
  $region4: #{spatial_forward.6} parent=0 // pred_region
    _
  $region5: #{spatial_forward.6} parent=0 // pred_fallthru
    _
  // Predicated region
  $region6: #{spatial_forward.6} parent=0 // pred_check
    _
  $region7: #{spatial_forward.6} parent=0 // pred_check_branch
    %11 = sbr.rel (0) target = $region9
  $region8: #{spatial_forward.6} parent=0 // pred_region
    _
  $region9: #{spatial_forward.6} parent=0 // pred_fallthru
    _
  // Predicated region
  $region10: #{spatial_forward.6} parent=0 // pred_check
    _
  $region11: #{spatial_forward.6} parent=0 // pred_check_branch
    %13 = sbr.rel (0) target = $region13
  $region12: #{spatial_forward.6} parent=0 // pred_region
    _
  $region13: #{spatial_forward.6} parent=0 // pred_fallthru
    _
  %v15 = vld [vmem:[%s0] sm:$0xf]
  %v16 = vld [vmem:[%s1] sm:$0xf]
  %v17 = vld [vmem:[%s1 + $0x4] sm:$0xf]
  %v18 = vld [vmem:[%s1 + $0x8] sm:$0xf]
  %v19 = vld [vmem:[%s1 + $0xc] sm:$0xf]
  %v20 = vld [vmem:[%s1 + $0x10] sm:$0xf]
  %v21 = vld [vmem:[%s1 + $0x14] sm:$0xf]
  %v22 = vld [vmem:[%s1 + $0x18] sm:$0xf]
  %v23 = vld [vmem:[%s1 + $0x1c] sm:$0xf]
  %v24 = vld [vmem:[%s1 + $0x20] sm:$0xf]
  %v25 = vld [vmem:[%s2] sm:$0x1]
  %v27 = vlaneseq
  %v28 = vshrl.u32 %v27, 7
  %v29 = vsub.s32 0, %v28
  %v30 = vrot.slane %v25, %v29
  %v41 = vunpack.c.l.b16 %v16
  %v42 = vunpack.c.l.b16 %v17
  %v43 = vunpack.c.l.b16 %v18
  %v44 = vunpack.c.l.b16 %v19
  %v45 = vunpack.c.l.b16 %v20
  %v46 = vunpack.c.l.b16 %v21
  %v47 = vunpack.c.l.b16 %v22
  %v48 = vunpack.c.l.b16 %v23
  %v49 = vunpack.c.l.b16 %v24
  %v50 = vpack.c.b16 %v42, %v41
  %v51 = vpack.c.b16 %v44, %v43
  %v52 = vpack.c.b16 %v46, %v45
  %v53 = vpack.c.b16 %v48, %v47
  %v54 = vpack.c.b16 %v49, %v49
  %vm59 = vcmask 588800
  %v61 = vsel %vm59, %v15, 0
  %vm63 = vcmask 1043456
  %v65 = vsel %vm63, %v54, 0
  %67 = vmatprep.subr.bf16.mxu0 0
  %68 = vmatpush1.bf16.msra.mxu0 %v50
  %69 = vmatprep.subr.bf16.mxu0 0
  %70 = vmatpush1.bf16.msra.mxu0 %v51
  %71 = vmatprep.subr.bf16.mxu0 0
  %72 = vmatpush1.bf16.msra.mxu0 %v52
  %73 = vmatprep.subr.bf16.mxu0 0
  %74 = vmatpush1.bf16.msra.mxu0 %v53
  %75 = vmatprep.subr.bf16.mxu0 0
  %76 = vmatpush1.bf16.msra.mxu0 %v65
  %77 = vmatprep.subr.bf16.mxu0 0
  %78 = vmatpush1.bf16.msra.mxu0 0
  %79 = vmatprep.subr.bf16.mxu0 0
  %80 = vmatpush1.bf16.msra.mxu0 0
  %81 = vmatprep.subr.bf16.mxu0 0
  %82 = vmatpush1.bf16.msra.mxu0 0
  %83 = vmatprep.subr.bf16.mxu0 0
  %84 = vmatpush1.bf16.msra.mxu0 0
  %85 = vmatprep.subr.bf16.mxu0 0
  %86 = vmatpush1.bf16.msra.mxu0 0
  %87 = vmatprep.subr.bf16.mxu0 0
  %88 = vmatpush1.bf16.msra.mxu0 0
  %89 = vmatprep.subr.bf16.mxu0 0
  %90 = vmatpush1.bf16.msra.mxu0 0
  %91 = vmatprep.subr.bf16.mxu0 0
  %92 = vmatpush1.bf16.msra.mxu0 0
  %93 = vmatprep.subr.bf16.mxu0 0
  %94 = vmatpush1.bf16.msra.mxu0 0
  %95 = vmatprep.subr.bf16.mxu0 0
  %96 = vmatpush1.bf16.msra.mxu0 0
  %97 = vmatprep.subr.bf16.mxu0 0
  %98 = vmatpush1.bf16.msra.mxu0 0
  %99 = vmatprep.mubr.bf16.mxu0 0
  %100 = vmatmul.mubr.bf16.gmra.mrb[0].mxu0 %v61
  %v101 = vpop.f32.mrb[0].mxu0
  %v102 = vadd.f32 %v30, %v101
  %v103 = vpop.f32.mrb[0].mxu0
  %v104 = vpop.f32.mrb[0].mxu0
  %v105 = vpop.f32.mrb[0].mxu0
  %106 = vdwg.mxu0
  %v107 = vmax.f32 %v102, 0.0
  %v108 = vpack.c.bf16 %v107, %v107
  %109 = vst [vmem:[%s3] sm:$0xf] %v108
  // Predicated region
  $region14: #{spatial_forward.6} parent=0 // pred_check
    _
  $region15: #{spatial_forward.6} parent=0 // pred_check_branch
    %111 = sbr.rel (0) target = $region17
  $region16: #{spatial_forward.6} parent=0 // pred_region
    _
  $region17: #{spatial_forward.6} parent=0 // pred_fallthru
    _
  // Predicated region
  $region18: #{spatial_forward.6} parent=0 // pred_check
    _
  $region19: #{spatial_forward.6} parent=0 // pred_check_branch
    %113 = sbr.rel (0) target = $region21
  $region20: #{spatial_forward.6} parent=0 // pred_region
    _
  $region21: #{spatial_forward.6} parent=0 // pred_fallthru
    _

// kernel: spatial_forward.7
$region0: #{spatial_forward.7}
  #allocation0 [shape = 'u32[]', space=smem, size = 0x4, offset = 0x4, fixed_abs, tag = 'smem constant byte address 0x4 - core index']
  #allocation1 [shape = 'u32[144,128]{1,0:T(1,128)}', space=vmem, size = 0x12000, scoped, tag = 'internal scratch']
  %s0 = inlined_call_operand.vmem [shape: bf16[8,128], index: 0, kind: input, shape index: {}]
  %s1 = inlined_call_operand.vmem [shape: bf16[128,128], index: 1, kind: input, shape index: {}]
  %s2 = inlined_call_operand.vmem [shape: f32[1,128], index: 2, kind: input, shape index: {}]
  %s3 = inlined_call_operand.vmem [shape: f32[2,8], index: 3, kind: input, shape index: {}]
  %s4 = inlined_call_operand.vmem [shape: f32[128,128], index: 4, kind: input, shape index: {}]
  %s5 = inlined_call_operand.vmem [shape: f32[1,128], index: 5, kind: input, shape index: {}]
  %s6 = inlined_call_operand.hbm [shape: f32[8,128], index: 6, kind: output, shape index: {0}]
  %s7 = inlined_call_operand.hbm [shape: f32[2,128], index: 7, kind: output, shape index: {1}]
  %8 = xla_tuple %s6, %s7
  %s9 = sld [smem:[#allocation0]]
  $region42: #{spatial_forward.7} parent=0
    _
  %s11 = ssub.s32 1, %s9
  %s12 = scalar_select 0, %s11, %s9
  $region1: #{spatial_forward.7} parent=0
    #allocation2 [shape = 'u8[4096]{0}', space=vmem, size = 0x1000, scoped, tag = 'output window, operand 0, single buffered']
    #allocation3 [shape = 's32[1]{0}', space=sflag, size = 0x4, scoped, tag = 'scoped memory for spatial_forward.7']
    #allocation4 [shape = 'u8[1024]{0}', space=vmem, size = 0x400, scoped, tag = 'output window, operand 1, single buffered']
    #allocation5 [shape = 's32[1]{0}', space=sflag, size = 0x4, scoped, tag = 'scoped memory for spatial_forward.7']
    %13 = vsyncpa [#allocation3], 0
    %14 = vsyncpa [#allocation5], 0
    // Predicated region
    $region2: #{spatial_forward.7} parent=1 // pred_check
      _
    $region3: #{spatial_forward.7} parent=1 // pred_check_branch
      %16 = sbr.rel (0) target = $region5
    $region4: #{spatial_forward.7} parent=1 // pred_region
      _
    $region5: #{spatial_forward.7} parent=1 // pred_fallthru
      _
    // Predicated region
    $region6: #{spatial_forward.7} parent=1 // pred_check
      _
    $region7: #{spatial_forward.7} parent=1 // pred_check_branch
      %18 = sbr.rel (0) target = $region9
    $region8: #{spatial_forward.7} parent=1 // pred_region
      _
    $region9: #{spatial_forward.7} parent=1 // pred_fallthru
      _
    // Predicated region
    $region10: #{spatial_forward.7} parent=1 // pred_check
      _
    $region11: #{spatial_forward.7} parent=1 // pred_check_branch
      %20 = sbr.rel (0) target = $region13
    $region12: #{spatial_forward.7} parent=1 // pred_region
      _
    $region13: #{spatial_forward.7} parent=1 // pred_fallthru
      _
    // Predicated region
    $region14: #{spatial_forward.7} parent=1 // pred_check
      _
    $region15: #{spatial_forward.7} parent=1 // pred_check_branch
      %22 = sbr.rel (0) target = $region17
    $region16: #{spatial_forward.7} parent=1 // pred_region
      _
    $region17: #{spatial_forward.7} parent=1 // pred_fallthru
      _
    // Predicated region
    $region18: #{spatial_forward.7} parent=1 // pred_check
      _
    $region19: #{spatial_forward.7} parent=1 // pred_check_branch
      %24 = sbr.rel (0) target = $region21
    $region20: #{spatial_forward.7} parent=1 // pred_region
      _
    $region21: #{spatial_forward.7} parent=1 // pred_fallthru
      _
    // Predicated region
    $region22: #{spatial_forward.7} parent=1 // pred_check
      _
    $region23: #{spatial_forward.7} parent=1 // pred_check_branch
      %26 = sbr.rel (0) target = $region25
    $region24: #{spatial_forward.7} parent=1 // pred_region
      _
    $region25: #{spatial_forward.7} parent=1 // pred_fallthru
      _
    %v28 = vld [vmem:[%s0] sm:$0xf]
    %v29 = vld [vmem:[%s1] sm:$0xf]
    %v30 = vld [vmem:[%s1 + $0x4] sm:$0xf]
    %v31 = vld [vmem:[%s1 + $0x8] sm:$0xf]
    %v32 = vld [vmem:[%s1 + $0xc] sm:$0xf]
    %v33 = vld [vmem:[%s1 + $0x10] sm:$0xf]
    %v34 = vld [vmem:[%s1 + $0x14] sm:$0xf]
    %v35 = vld [vmem:[%s1 + $0x18] sm:$0xf]
    %v36 = vld [vmem:[%s1 + $0x1c] sm:$0xf]
    %v37 = vld [vmem:[%s1 + $0x20] sm:$0xf]
    %v38 = vld [vmem:[%s1 + $0x24] sm:$0xf]
    %v39 = vld [vmem:[%s1 + $0x28] sm:$0xf]
    %v40 = vld [vmem:[%s1 + $0x2c] sm:$0xf]
    %v41 = vld [vmem:[%s1 + $0x30] sm:$0xf]
    %v42 = vld [vmem:[%s1 + $0x34] sm:$0xf]
    %v43 = vld [vmem:[%s1 + $0x38] sm:$0xf]
    %v44 = vld [vmem:[%s1 + $0x3c] sm:$0xf]
    %v45 = vld [vmem:[%s2] sm:$0x1]
    %v47 = vlaneseq
    %v48 = vshrl.u32 %v47, 7
    %v49 = vsub.s32 0, %v48
    %v50 = vrot.slane %v45, %v49
    %v68 = vunpack.c.l.b16 %v29
    %v69 = vunpack.c.l.b16 %v30
    %v70 = vunpack.c.l.b16 %v31
    %v71 = vunpack.c.l.b16 %v32
    %v72 = vunpack.c.l.b16 %v33
    %v73 = vunpack.c.l.b16 %v34
    %v74 = vunpack.c.l.b16 %v35
    %v75 = vunpack.c.l.b16 %v36
    %v76 = vunpack.c.l.b16 %v37
    %v77 = vunpack.c.l.b16 %v38
    %v78 = vunpack.c.l.b16 %v39
    %v79 = vunpack.c.l.b16 %v40
    %v80 = vunpack.c.l.b16 %v41
    %v81 = vunpack.c.l.b16 %v42
    %v82 = vunpack.c.l.b16 %v43
    %v83 = vunpack.c.l.b16 %v44
    %v84 = vpack.c.b16 %v69, %v68
    %v85 = vpack.c.b16 %v71, %v70
    %v86 = vpack.c.b16 %v73, %v72
    %v87 = vpack.c.b16 %v75, %v74
    %v88 = vpack.c.b16 %v77, %v76
    %v89 = vpack.c.b16 %v79, %v78
    %v90 = vpack.c.b16 %v81, %v80
    %v91 = vpack.c.b16 %v83, %v82
    %100 = vmatprep.subr.bf16.mxu0 0
    %101 = vmatpush1.bf16.msra.mxu0 %v84
    %102 = vmatprep.subr.bf16.mxu0 0
    %103 = vmatpush1.bf16.msra.mxu0 %v85
    %104 = vmatprep.subr.bf16.mxu0 0
    %105 = vmatpush1.bf16.msra.mxu0 %v86
    %106 = vmatprep.subr.bf16.mxu0 0
    %107 = vmatpush1.bf16.msra.mxu0 %v87
    %108 = vmatprep.subr.bf16.mxu0 0
    %109 = vmatpush1.bf16.msra.mxu0 %v88
    %110 = vmatprep.subr.bf16.mxu0 0
    %111 = vmatpush1.bf16.msra.mxu0 %v89
    %112 = vmatprep.subr.bf16.mxu0 0
    %113 = vmatpush1.bf16.msra.mxu0 %v90
    %114 = vmatprep.subr.bf16.mxu0 0
    %115 = vmatpush1.bf16.msra.mxu0 %v91
    %116 = vmatprep.subr.bf16.mxu0 0
    %117 = vmatpush1.bf16.msra.mxu0 0
    %118 = vmatprep.subr.bf16.mxu0 0
    %119 = vmatpush1.bf16.msra.mxu0 0
    %120 = vmatprep.subr.bf16.mxu0 0
    %121 = vmatpush1.bf16.msra.mxu0 0
    %122 = vmatprep.subr.bf16.mxu0 0
    %123 = vmatpush1.bf16.msra.mxu0 0
    %124 = vmatprep.subr.bf16.mxu0 0
    %125 = vmatpush1.bf16.msra.mxu0 0
    %126 = vmatprep.subr.bf16.mxu0 0
    %127 = vmatpush1.bf16.msra.mxu0 0
    %128 = vmatprep.subr.bf16.mxu0 0
    %129 = vmatpush1.bf16.msra.mxu0 0
    %130 = vmatprep.subr.bf16.mxu0 0
    %131 = vmatpush1.bf16.msra.mxu0 0
    %132 = vmatprep.mubr.bf16.mxu0 0
    %133 = vmatmul.mubr.bf16.gmra.mrb[0].mxu0 %v28
    %v134 = vpop.f32.mrb[0].mxu0
    %v135 = vadd.f32 %v50, %v134
    %v136 = vpop.f32.mrb[0].mxu0
    %v137 = vpop.f32.mrb[0].mxu0
    %v138 = vpop.f32.mrb[0].mxu0
    %139 = vdwg.mxu0
    %v140 = vmax.f32 %v135, 0.0
    %141 = vst [vmem:[#allocation2] sm:$0xff] %v140
    %v142 = vld [vmem:[%s3] sm:$0x3]
    %vm143 = vcmask 64512
    %v145 = vsel %vm143, %v142, 0
    %147 = vmatprep.subr.mxu0 0.0
    %148 = vmatpush1.msra.mxu0 %v140
    %149 = vmatprep.subr.mxu0 0.0
    %150 = vmatpush1.msra.mxu0 0.0
    %151 = vmatprep.subr.mxu0 0.0
    %152 = vmatpush1.msra.mxu0 0.0
    %153 = vmatprep.subr.mxu0 0.0
    %154 = vmatpush1.msra.mxu0 0.0
    %155 = vmatprep.subr.mxu0 0.0
    %156 = vmatpush1.msra.mxu0 0.0
    %157 = vmatprep.subr.mxu0 0.0
    %158 = vmatpush1.msra.mxu0 0.0
    %159 = vmatprep.subr.mxu0 0.0
    %160 = vmatpush1.msra.mxu0 0.0
    %161 = vmatprep.subr.mxu0 0.0
    %162 = vmatpush1.msra.mxu0 0.0
    %163 = vmatprep.subr.mxu0 0.0
    %164 = vmatpush1.msra.mxu0 0.0
    %165 = vmatprep.subr.mxu0 0.0
    %166 = vmatpush1.msra.mxu0 0.0
    %167 = vmatprep.subr.mxu0 0.0
    %168 = vmatpush1.msra.mxu0 0.0
    %169 = vmatprep.subr.mxu0 0.0
    %170 = vmatpush1.msra.mxu0 0.0
    %171 = vmatprep.subr.mxu0 0.0
    %172 = vmatpush1.msra.mxu0 0.0
    %173 = vmatprep.subr.mxu0 0.0
    %174 = vmatpush1.msra.mxu0 0.0
    %175 = vmatprep.subr.mxu0 0.0
    %176 = vmatpush1.msra.mxu0 0.0
    %177 = vmatprep.subr.mxu0 0.0
    %178 = vmatpush1.msra.mxu0 0.0
    %179 = vmatprep.subr.mxu0 0.0
    %180 = vmatpush1.msra.mxu0 0.0
    %181 = vmatprep.subr.mxu0 0.0
    %182 = vmatpush1.msra.mxu0 0.0
    %183 = vmatprep.subr.mxu0 0.0
    %184 = vmatpush1.msra.mxu0 0.0
    %185 = vmatprep.subr.mxu0 0.0
    %186 = vmatpush1.msra.mxu0 0.0
    %187 = vmatprep.subr.mxu0 0.0
    %188 = vmatpush1.msra.mxu0 0.0
    %189 = vmatprep.subr.mxu0 0.0
    %190 = vmatpush1.msra.mxu0 0.0
    %191 = vmatprep.subr.mxu0 0.0
    %192 = vmatpush1.msra.mxu0 0.0
    %193 = vmatprep.subr.mxu0 0.0
    %194 = vmatpush1.msra.mxu0 0.0
    %195 = vmatprep.subr.mxu0 0.0
    %196 = vmatpush1.msra.mxu0 0.0
    %197 = vmatprep.subr.mxu0 0.0
    %198 = vmatpush1.msra.mxu0 0.0
    %199 = vmatprep.subr.mxu0 0.0
    %200 = vmatpush1.msra.mxu0 0.0
    %201 = vmatprep.subr.mxu0 0.0
    %202 = vmatpush1.msra.mxu0 0.0
    %203 = vmatprep.subr.mxu0 0.0
    %204 = vmatpush1.msra.mxu0 0.0
    %205 = vmatprep.subr.mxu0 0.0
    %206 = vmatpush1.msra.mxu0 0.0
    %207 = vmatprep.subr.mxu0 0.0
    %208 = vmatpush1.msra.mxu0 0.0
    %209 = vmatprep.subr.mxu0 0.0
    %210 = vmatpush1.msra.mxu0 0.0
    %211 = vmatprep.mubr.f32.mxu0 0.0
    %212 = vmatmul.mubr.f32.gmra.mrb[0].mxu0 %v145
    %v213 = vpop.f32.mrb[0].mxu0
    %v214 = vadd.f32 0.0, %v213
    %v215 = vpop.f32.mrb[0].mxu0
    %216 = vdwg.mxu0
    %v217 = vld [vmem:[%s4] sm:$0xff]
    %v218 = vld [vmem:[%s4 + $0x8] sm:$0xff]
    %v219 = vld [vmem:[%s4 + $0x10] sm:$0xff]
    %v220 = vld [vmem:[%s4 + $0x18] sm:$0xff]
    %v221 = vld [vmem:[%s4 + $0x20] sm:$0xff]
    %v222 = vld [vmem:[%s4 + $0x28] sm:$0xff]
    %v223 = vld [vmem:[%s4 + $0x30] sm:$0xff]
    %v224 = vld [vmem:[%s4 + $0x38] sm:$0xff]
    %v225 = vld [vmem:[%s4 + $0x40] sm:$0xff]
    %v226 = vld [vmem:[%s4 + $0x48] sm:$0xff]
    %v227 = vld [vmem:[%s4 + $0x50] sm:$0xff]
    %v228 = vld [vmem:[%s4 + $0x58] sm:$0xff]
    %v229 = vld [vmem:[%s4 + $0x60] sm:$0xff]
    %v230 = vld [vmem:[%s4 + $0x68] sm:$0xff]
    %v231 = vld [vmem:[%s4 + $0x70] sm:$0xff]
    %v232 = vld [vmem:[%s4 + $0x78] sm:$0xff]
    %v233 = vld [vmem:[%s5] sm:$0x1]
    %v235 = vlaneseq
    %v236 = vshrl.u32 %v235, 7
    %v237 = vsub.s32 0, %v236
    %v238 = vrot.slane %v233, %v237
    %240 = vmatprep.subr.mxu0 0.0
    %241 = vmatpush1.msra.mxu0 %v217
    %242 = vmatprep.subr.mxu0 0.0
    %243 = vmatpush1.msra.mxu0 %v218
    %244 = vmatprep.subr.mxu0 0.0
    %245 = vmatpush1.msra.mxu0 %v219
    %246 = vmatprep.subr.mxu0 0.0
    %247 = vmatpush1.msra.mxu0 %v220
    %248 = vmatprep.subr.mxu0 0.0
    %249 = vmatpush1.msra.mxu0 %v221
    %250 = vmatprep.subr.mxu0 0.0
    %251 = vmatpush1.msra.mxu0 %v222
    %252 = vmatprep.subr.mxu0 0.0
    %253 = vmatpush1.msra.mxu0 %v223
    %254 = vmatprep.subr.mxu0 0.0
    %255 = vmatpush1.msra.mxu0 %v224
    %256 = vmatprep.subr.mxu0 0.0
    %257 = vmatpush1.msra.mxu0 %v225
    %258 = vmatprep.subr.mxu0 0.0
    %259 = vmatpush1.msra.mxu0 %v226
    %260 = vmatprep.subr.mxu0 0.0
    %261 = vmatpush1.msra.mxu0 %v227
    %262 = vmatprep.subr.mxu0 0.0
    %263 = vmatpush1.msra.mxu0 %v228
    %264 = vmatprep.subr.mxu0 0.0
    %265 = vmatpush1.msra.mxu0 %v229
    %266 = vmatprep.subr.mxu0 0.0
    %267 = vmatpush1.msra.mxu0 %v230
    %268 = vmatprep.subr.mxu0 0.0
    %269 = vmatpush1.msra.mxu0 %v231
    %270 = vmatprep.subr.mxu0 0.0
    %271 = vmatpush1.msra.mxu0 %v232
    %272 = vmatprep.subr.mxu0 0.0
    %273 = vmatpush1.msra.mxu0 0.0
    %274 = vmatprep.subr.mxu0 0.0
    %275 = vmatpush1.msra.mxu0 0.0
    %276 = vmatprep.subr.mxu0 0.0
    %277 = vmatpush1.msra.mxu0 0.0
    %278 = vmatprep.subr.mxu0 0.0
    %279 = vmatpush1.msra.mxu0 0.0
    %280 = vmatprep.subr.mxu0 0.0
    %281 = vmatpush1.msra.mxu0 0.0
    %282 = vmatprep.subr.mxu0 0.0
    %283 = vmatpush1.msra.mxu0 0.0
    %284 = vmatprep.subr.mxu0 0.0
    %285 = vmatpush1.msra.mxu0 0.0
    %286 = vmatprep.subr.mxu0 0.0
    %287 = vmatpush1.msra.mxu0 0.0
    %288 = vmatprep.subr.mxu0 0.0
    %289 = vmatpush1.msra.mxu0 0.0
    %290 = vmatprep.subr.mxu0 0.0
    %291 = vmatpush1.msra.mxu0 0.0
    %292 = vmatprep.subr.mxu0 0.0
    %293 = vmatpush1.msra.mxu0 0.0
    %294 = vmatprep.subr.mxu0 0.0
    %295 = vmatpush1.msra.mxu0 0.0
    %296 = vmatprep.subr.mxu0 0.0
    %297 = vmatpush1.msra.mxu0 0.0
    %298 = vmatprep.subr.mxu0 0.0
    %299 = vmatpush1.msra.mxu0 0.0
    %300 = vmatprep.subr.mxu0 0.0
    %301 = vmatpush1.msra.mxu0 0.0
    %302 = vmatprep.subr.mxu0 0.0
    %303 = vmatpush1.msra.mxu0 0.0
    %304 = vmatprep.mubr.f32.mxu0 0.0
    %305 = vmatmul.mubr.f32.gmra.mrb[0].mxu0 %v214
    %v306 = vpop.f32.mrb[0].mxu0
    %v307 = vadd.f32 %v238, %v306
    %v308 = vpop.f32.mrb[0].mxu0
    %309 = vdwg.mxu0
    %310 = vst [vmem:[#allocation4] sm:$0x3] %v307
    // Predicated region
    $region26: #{spatial_forward.7} parent=1 // pred_check
      _
    $region27: #{spatial_forward.7} parent=1 // pred_check_branch
      %312 = sbr.rel (0) target = $region29
    $region28: #{spatial_forward.7} parent=1 // pred_region
      %s314 = ssub.s32 128, 128
      %315 = vsyncadd [#allocation3], %s314
      %s317 = sshll.u32 [#allocation2], 4
      %s318 = int_to_ptr.vmem [resolvable:$true] %s317
      %320 = dma.vmem_to_hbm [thread:$0]  %s318, 128, %s6, [#allocation3]
    $region29: #{spatial_forward.7} parent=1 // pred_fallthru
      _
    // Predicated region
    $region30: #{spatial_forward.7} parent=1 // pred_check
      _
    $region31: #{spatial_forward.7} parent=1 // pred_check_branch
      %322 = sbr.rel (0) target = $region33
    $region32: #{spatial_forward.7} parent=1 // pred_region
      %s324 = ssub.s32 32, 32
      %325 = vsyncadd [#allocation5], %s324
      %s327 = sshll.u32 [#allocation4], 4
      %s328 = int_to_ptr.vmem [resolvable:$true] %s327
      %330 = dma.vmem_to_hbm [thread:$0]  %s328, 32, %s7, [#allocation5]
    $region33: #{spatial_forward.7} parent=1 // pred_fallthru
      _
    // Predicated region
    $region34: #{spatial_forward.7} parent=1 // pred_check
      _
    $region35: #{spatial_forward.7} parent=1 // pred_check_branch
      %332 = sbr.rel (0) target = $region37
    $region36: #{spatial_forward.7} parent=1 // pred_region
      %333 = dma.done [#allocation3], 128
    $region37: #{spatial_forward.7} parent=1 // pred_fallthru
      _
    // Predicated region
    $region38: #{spatial_forward.7} parent=1 // pred_check
      _
    $region39: #{spatial_forward.7} parent=1 // pred_check_branch
      %335 = sbr.rel (0) target = $region41
    $region40: #{spatial_forward.7} parent=1 // pred_region
      %336 = dma.done [#allocation5], 32
    $region41: #{spatial_forward.7} parent=1 // pred_fallthru
      _
    %337 = vsyncpa [#allocation3], 1
    %338 = vsyncpa [#allocation5], 1

</llo_original>
